<compile_context>
chip_gen: v6e
topology: v6e:2x2x1
jax: 0.10.0
libtpu: 0.0.40
codegen_flags: <defaults>
</compile_context>

<pallas_src>
from functools import partial

import jax
import jax.numpy as jnp
from jax.experimental import pallas as pl
from jax.experimental.pallas import tpu as pltpu

EPS = 1e-5
LANE = 128


# ----------------------------- in-kernel helpers -----------------------------
def _image_stats(acc):
    """Per-tile [sum, sumsq] over rows of acc (Rows, C) -> two (1, C) arrays.

    Accumulates (8, C) partials with cheap VPU adds, then one small cross-sublane
    reduction (instead of a full XLU sweep over all rows).
    """
    rows, c = acc.shape
    sq = acc * acc
    if rows % 8 == 0:
        s8 = jnp.sum(acc.reshape(rows // 8, 8, c), axis=0)
        q8 = jnp.sum(sq.reshape(rows // 8, 8, c), axis=0)
        s = jnp.sum(s8, axis=0, keepdims=True)
        q = jnp.sum(q8, axis=0, keepdims=True)
    else:
        s = jnp.sum(acc, axis=0, keepdims=True)
        q = jnp.sum(sq, axis=0, keepdims=True)
    return s, q


def _conv3x3_tail(zpad_ref, kbuf_ref, w_ref, b_ref, y_ref, st_ref):
    """3x3 conv of a zero-padded tile + bias; write pre-BN output block and stats.

    zpad_ref: (TB+2, W+2, C)   fp32 zero-padded input tile
    kbuf_ref: (TB+2, W, 3*C)   matmul-dtype scratch holding the 3 kw shifts (K axis)
    w_ref:    (3, 3*C, Co)     weights, K ordered kw-major within each kh
    """
    tbp, wp, c = zpad_ref.shape
    tb, w = tbp - 2, wp - 2
    co = w_ref.shape[-1]

    # 3 width-compaction copies (one per kw shift); destination lane offsets are
    # multiples of 128 so the stores are aligned / unmasked.
    for kw in range(3):
        kbuf_ref[:, :, kw * c:(kw + 1) * c] = (
            zpad_ref[:, kw:kw + w, :].astype(kbuf_ref.dtype))

    # 3 MXU matmuls with K = 3*C; each kh tap is a row-slice along the outer
    # (untiled) dim of kbuf, so no further relayout copies are needed.
    acc = jnp.zeros((tb * w, co), jnp.float32)
    for kh in range(3):
        patch = kbuf_ref[kh:kh + tb, :, :].reshape(tb * w, 3 * c)
        acc = acc + jnp.dot(patch, w_ref[kh],
                            preferred_element_type=jnp.float32)
    acc = acc + b_ref[...]

    y_ref[...] = acc.reshape(tb, w, co).astype(y_ref.dtype)
    s, q = _image_stats(acc)
    st_ref[0:1, :] = s
    st_ref[1:2, :] = q


# --------------------------------- kernels -----------------------------------
def _conv1_kernel(xc_ref, xt_ref, xb_ref, w_ref, b_ref, y_ref, st_ref,
                  zpad_ref, kbuf_ref):
    # xc: (TB, W, Cin) raw input rows; xt/xb: (1, W, Cin) clamped halo rows.
    tb, w, cin = xc_ref.shape
    r = pl.program_id(1)
    last = pl.num_programs(1) - 1
    # Zero the scratch (covers the spatial halo AND the Cin -> Ci lane padding),
    # then drop the raw rows into the interior; border halo rows stay zero.
    zpad_ref[...] = jnp.zeros(zpad_ref.shape, zpad_ref.dtype)
    zpad_ref[1:tb + 1, 1:w + 1, 0:cin] = xc_ref[...]
    zpad_ref[0:1, 1:w + 1, 0:cin] = jnp.where(r > 0, xt_ref[...], 0.0)
    zpad_ref[tb + 1:tb + 2, 1:w + 1, 0:cin] = jnp.where(r < last, xb_ref[...], 0.0)
    _conv3x3_tail(zpad_ref, kbuf_ref, w_ref, b_ref, y_ref, st_ref)


def _conv2_kernel(yc_ref, yt_ref, yb_ref, sc_ref, sh_ref, w_ref, b_ref,
                  y2_ref, st_ref, zpad_ref, kbuf_ref):
    # yc: (TB, W, Co) pre-BN conv1 rows; BN1 + ReLU is fused here before conv2.
    tb, w, co = yc_ref.shape
    r = pl.program_id(1)
    last = pl.num_programs(1) - 1
    sc = sc_ref[...]
    sh = sh_ref[...]

    def bn_relu(v):
        return jnp.maximum(v.astype(jnp.float32) * sc + sh, 0.0)

    # Interior + halo rows (halo data comes from neighbour blocks; zero at borders).
    zpad_ref[1:tb + 1, 1:w + 1, :] = bn_relu(yc_ref[...])
    zpad_ref[0:1, 1:w + 1, :] = jnp.where(r > 0, bn_relu(yt_ref[...]), 0.0)
    zpad_ref[tb + 1:tb + 2, 1:w + 1, :] = jnp.where(r < last, bn_relu(yb_ref[...]), 0.0)
    # Left/right zero columns (also cover the four halo corners).
    zcol = jnp.zeros((tb + 2, 1, co), zpad_ref.dtype)
    zpad_ref[:, 0:1, :] = zcol
    zpad_ref[:, w + 1:w + 2, :] = zcol
    _conv3x3_tail(zpad_ref, kbuf_ref, w_ref, b_ref, y2_ref, st_ref)


def _bn_relu_out_kernel(y_ref, sc_ref, sh_ref, o_ref, *, c_out):
    v = jnp.maximum(y_ref[...].astype(jnp.float32) * sc_ref[...] + sh_ref[...], 0.0)
    o_ref[...] = v[:, :, :c_out].astype(o_ref.dtype)   # drop channel pad in-kernel


# --------------------------------- wrapper ------------------------------------
def _round_up(v, m):
    return ((v + m - 1) // m) * m


def _pick_row_block(h, w, c, mm_itemsize, budget=8 * 1024 * 1024):
    """Largest divisor of h (<= 64 rows) whose conv scratch fits the VMEM budget."""
    best = 1
    for tb in range(1, min(h, 64) + 1):
        if h % tb:
            continue
        scratch = (tb + 2) * ((w + 2) * c * 4 + w * 3 * c * mm_itemsize)
        if scratch <= budget:
            best = tb
    return best


def _bn_affine(stats, count, gamma, beta, c_true, c_pad):
    """Finalize BN from per-tile [sum, sumsq] partials -> (1, c_pad) scale/shift."""
    tot = jnp.sum(stats, axis=(0, 1))                       # (2, c_pad)
    mean = tot[0] / count
    # biased variance (torch BN forward); clamp against E[x^2]-E[x]^2 cancellation.
    # TODO(synk): switch to a two-pass / Welford variance for very large activations.
    var = jnp.maximum(tot[1] / count - mean * mean, 0.0)
    g = jnp.pad(gamma.astype(jnp.float32), (0, c_pad - c_true))
    b = jnp.pad(beta.astype(jnp.float32), (0, c_pad - c_true))
    scale = g * jax.lax.rsqrt(var + EPS)
    shift = b - mean * scale
    return scale.reshape(1, c_pad), shift.reshape(1, c_pad)


def _prep_w(w, ci_true, ci_pad, co_pad, dtype):
    """torch conv weight (Co, Ci, 3, 3) -> (3, 3*ci_pad, co_pad); K = kw-major per kh."""
    co_true = w.shape[0]
    wk = jnp.transpose(w, (2, 3, 1, 0)).astype(jnp.float32)          # (kh, kw, ci, co)
    wk = jnp.pad(wk, ((0, 0), (0, 0), (0, ci_pad - ci_true), (0, co_pad - co_true)))
    return wk.reshape(3, 3 * ci_pad, co_pad).astype(dtype)            # cast once


def _prep_b(v, co_true, co_pad):
    return jnp.pad(v.astype(jnp.float32), (0, co_pad - co_true)).reshape(1, co_pad)


def convolutional_block(x_nchw, params, *, matmul_dtype=jnp.bfloat16,
                        act_dtype=None, row_block=None):
    """Pallas forward of ConvolutionalBlock. x_nchw: (N, Cin, H, W) -> (N, Cout, H, W).

    matmul_dtype: bf16 (default) runs the MXU at native rate on v5e/v6e/v7x with fp32
      accumulation; float32 gives exact parity with the fp32 PyTorch reference.
    act_dtype:   dtype of the pre-BN activations streamed through HBM between phases
      (defaults to matmul_dtype).
    row_block:   rows per grid step (must divide H); default picks the largest divisor
      whose conv scratch fits ~8 MiB of VMEM.
    """
    w1, b1, g1, be1, w2, b2, g2, be2 = params
    if act_dtype is None:
        act_dtype = matmul_dtype
    n, cin, h, w = x_nchw.shape
    cout = w1.shape[0]                         # torch conv weight: (Cout, Cin, 3, 3)
    ci = _round_up(cin, LANE)
    co = _round_up(cout, LANE)
    count = float(n * h * w)

    mm_itemsize = jnp.dtype(matmul_dtype).itemsize
    tb = row_block if row_block is not None else _pick_row_block(
        h, w, max(ci, co), mm_itemsize)
    if h % tb:
        raise ValueError(f"row_block={tb} must divide H={h}")
    rblocks = h // tb

    # Host-side prep is layout-only (NCHW -> NHWC).  No HBM-materialized channel
    # pad / spatial halo of the input: the kernels pad into VMEM scratch instead.
    x = jnp.transpose(x_nchw, (0, 2, 3, 1)).astype(jnp.float32)
    w1_k = _prep_w(w1, cin, ci, co, matmul_dtype)
    w2_k = _prep_w(w2, cout, co, co, matmul_dtype)
    b1_k = _prep_b(b1, cout, co)
    b2_k = _prep_b(b2, cout, co)

    cparams = pltpu.CompilerParams(
        dimension_semantics=("parallel", "parallel"),
        vmem_limit_bytes=64 * 1024 * 1024)

    # Row-block index maps: centre block + 1-row halos (clamped at image borders;
    # kernels zero the clamped halo rows, so the clamp only avoids OOB DMA).
    cen_map = lambda i, r: (i, r, 0, 0)
    top_map = lambda i, r: (i, jnp.maximum(r * tb - 1, 0), 0, 0)
    bot_map = lambda i, r: (i, jnp.minimum((r + 1) * tb, h - 1), 0, 0)
    w_map = lambda i, r: (0, 0, 0)
    vec_map = lambda i, r: (0, 0)
    stat_map = lambda i, r: (i, r, 0, 0)
    grid = (n, rblocks)

    # ---- phase 1: conv1 (pre-BN) + per-tile stats --------------------------------
    y1, st1 = pl.pallas_call(
        _conv1_kernel,
        grid=grid,
        in_specs=[pl.BlockSpec((None, tb, w, cin), cen_map),
                  pl.BlockSpec((None, 1, w, cin), top_map),
                  pl.BlockSpec((None, 1, w, cin), bot_map),
                  pl.BlockSpec((3, 3 * ci, co), w_map),
                  pl.BlockSpec((1, co), vec_map)],
        out_specs=(pl.BlockSpec((None, tb, w, co), cen_map),
                   pl.BlockSpec((None, None, 2, co), stat_map)),
        out_shape=(jax.ShapeDtypeStruct((n, h, w, co), act_dtype),
                   jax.ShapeDtypeStruct((n, rblocks, 2, co), jnp.float32)),
        scratch_shapes=[pltpu.VMEM((tb + 2, w + 2, ci), jnp.float32),
                        pltpu.VMEM((tb + 2, w, 3 * ci), matmul_dtype)],
        compiler_params=cparams,
    )(x, x, x, w1_k, b1_k)

    sc1, sh1 = _bn_affine(st1, count, g1, be1, cout, co)

    # ---- phase 2: BN1 + ReLU + conv2 (pre-BN) + per-tile stats --------------------
    y2, st2 = pl.pallas_call(
        _conv2_kernel,
        grid=grid,
        in_specs=[pl.BlockSpec((None, tb, w, co), cen_map),
                  pl.BlockSpec((None, 1, w, co), top_map),
                  pl.BlockSpec((None, 1, w, co), bot_map),
                  pl.BlockSpec((1, co), vec_map),     # BN1 scale
                  pl.BlockSpec((1, co), vec_map),     # BN1 shift
                  pl.BlockSpec((3, 3 * co, co), w_map),
                  pl.BlockSpec((1, co), vec_map)],    # conv2 bias
        out_specs=(pl.BlockSpec((None, tb, w, co), cen_map),
                   pl.BlockSpec((None, None, 2, co), stat_map)),
        out_shape=(jax.ShapeDtypeStruct((n, h, w, co), act_dtype),
                   jax.ShapeDtypeStruct((n, rblocks, 2, co), jnp.float32)),
        scratch_shapes=[pltpu.VMEM((tb + 2, w + 2, co), jnp.float32),
                        pltpu.VMEM((tb + 2, w, 3 * co), matmul_dtype)],
        compiler_params=cparams,
    )(y1, y1, y1, sc1, sh1, w2_k, b2_k)

    sc2, sh2 = _bn_affine(st2, count, g2, be2, cout, co)

    # ---- phase 3: BN2 + ReLU epilogue (channel pad dropped in-kernel) -------------
    out_nhwc = pl.pallas_call(
        partial(_bn_relu_out_kernel, c_out=cout),
        grid=grid,
        in_specs=[pl.BlockSpec((None, tb, w, co), cen_map),
                  pl.BlockSpec((1, co), vec_map),
                  pl.BlockSpec((1, co), vec_map)],
        out_specs=pl.BlockSpec((None, tb, w, cout), cen_map),
        out_shape=jax.ShapeDtypeStruct((n, h, w, cout), jnp.float32),
        compiler_params=cparams,
    )(y2, sc2, sh2)

    # NHWC -> NCHW to honour the PyTorch contract.
    # TODO(synk): let downstream UNet stages consume NHWC directly to skip this pass.
    return jnp.transpose(out_nhwc, (0, 3, 1, 2))


# ------------------------------ pure-JAX reference -----------------------------
def _reference(x_nchw, params):
    w1, b1, g1, be1, w2, b2, g2, be2 = params

    def conv_bn_relu(x, w, b, g, be):
        y = jax.lax.conv_general_dilated(
            x, w, window_strides=(1, 1), padding="SAME",
            dimension_numbers=("NCHW", "OIHW", "NCHW"))
        y = y + b[None, :, None, None]
        mean = y.mean(axis=(0, 2, 3), keepdims=True)
        var = y.var(axis=(0, 2, 3), keepdims=True)            # biased, like torch BN
        yn = (y - mean) * jax.lax.rsqrt(var + EPS)
        yn = yn * g[None, :, None, None] + be[None, :, None, None]
        return jnp.maximum(yn, 0.0)

    hmid = conv_bn_relu(x_nchw, w1, b1, g1, be1)
    return conv_bn_relu(hmid, w2, b2, g2, be2)


if __name__ == "__main__":
    N, in_c, out_c, H, W = 2, 4, 8, 16, 16
    key = jax.random.PRNGKey(0)
    ks = jax.random.split(key, 9)

    x = jax.random.normal(ks[0], (N, in_c, H, W), jnp.float32)
    params = (
        0.1 * jax.random.normal(ks[1], (out_c, in_c, 3, 3), jnp.float32),   # conv1 w
        0.1 * jax.random.normal(ks[2], (out_c,), jnp.float32),              # conv1 b
        1.0 + 0.1 * jax.random.normal(ks[3], (out_c,), jnp.float32),        # bn1 gamma
        0.1 * jax.random.normal(ks[4], (out_c,), jnp.float32),              # bn1 beta
        0.1 * jax.random.normal(ks[5], (out_c, out_c, 3, 3), jnp.float32),  # conv2 w
        0.1 * jax.random.normal(ks[6], (out_c,), jnp.float32),              # conv2 b
        1.0 + 0.1 * jax.random.normal(ks[7], (out_c,), jnp.float32),        # bn2 gamma
        0.1 * jax.random.normal(ks[8], (out_c,), jnp.float32),              # bn2 beta
    )

    ref = _reference(x, params)

    # fp32 operand path: exact parity with the fp32 reference; row_block=8 exercises
    # the multi-row-block halo exchange (R=2).
    out32 = jax.block_until_ready(
        convolutional_block(x, params, matmul_dtype=jnp.float32, row_block=8))
    assert out32.shape == (N, out_c, H, W)
    err32 = float(jnp.max(jnp.abs(out32 - ref)))
    assert jnp.allclose(out32, ref, atol=2e-3, rtol=2e-3), f"fp32 max abs err {err32}"

    # Default path: bf16 MXU operands + bf16 inter-phase activations in HBM.
    out_bf = jax.block_until_ready(convolutional_block(x, params))
    assert out_bf.shape == (N, out_c, H, W)
    errbf = float(jnp.max(jnp.abs(out_bf - ref)))
    assert jnp.allclose(out_bf, ref, atol=1e-1, rtol=1e-1), f"bf16 max abs err {errbf}"

    print("KERNEL_OK")
</pallas_src>

<mosaic_0001>
module attributes {stable_mosaic.version = 11 : i64} {
  func.func @_conv1_kernel(%arg0: i32, %arg1: i32, %arg2: memref<1x8x16x4xf32, #tpu.memory_space<vmem>>, %arg3: memref<1x1x16x4xf32, #tpu.memory_space<vmem>>, %arg4: memref<1x1x16x4xf32, #tpu.memory_space<vmem>>, %arg5: memref<3x384x128xf32, #tpu.memory_space<vmem>>, %arg6: memref<1x128xf32, #tpu.memory_space<vmem>>, %arg7: memref<1x8x16x128xf32, #tpu.memory_space<vmem>>, %arg8: memref<1x1x2x128xf32, #tpu.memory_space<vmem>>, %arg9: memref<10x18x128xf32, #tpu.memory_space<vmem>>, %arg10: memref<10x16x384xf32, #tpu.memory_space<vmem>>) attributes {dimension_semantics = [#tpu.dimension_semantics<parallel>, #tpu.dimension_semantics<parallel>], iteration_bounds = array<i64: 2, 2>, scalar_prefetch = 0 : i64, scratch_operands = 2 : i64, tpu.core_type = #tpu.core_type<tc>, window_params = [{transform_indices = @transform_0, window_bounds = array<i64: 1, 8, 16, 4>}, {transform_indices = @transform_1, window_bounds = array<i64: 1, 1, 16, 4>}, {transform_indices = @transform_2, window_bounds = array<i64: 1, 1, 16, 4>}, {pipeline_mode = #tpu.pipeline_mode<synchronous>, transform_indices = @transform_3, window_bounds = array<i64: 3, 384, 128>}, {pipeline_mode = #tpu.pipeline_mode<synchronous>, transform_indices = @transform_4, window_bounds = array<i64: 1, 128>}, {transform_indices = @transform_5, window_bounds = array<i64: 1, 8, 16, 128>}, {transform_indices = @transform_6, window_bounds = array<i64: 1, 1, 2, 128>}]} {
    %cst = arith.constant 0.000000e+00 : f32
    %0 = vector.broadcast %cst : f32 to vector<10x18x128xf32>
    %c0 = arith.constant 0 : index
    %c0_0 = arith.constant 0 : index
    %c0_1 = arith.constant 0 : index
    %1 = vector.load %arg9[%c0, %c0_0, %c0_1] : memref<10x18x128xf32, #tpu.memory_space<vmem>>, vector<10x18x128xf32>
    tpu.vector_store %arg9[%c0, %c0_0, %c0_1], %0 {strides = array<i32>} : memref<10x18x128xf32, #tpu.memory_space<vmem>>, vector<10x18x128xf32>,
    %c0_2 = arith.constant 0 : index
    %c0_3 = arith.constant 0 : index
    %c0_4 = arith.constant 0 : index
    %c0_5 = arith.constant 0 : index
    %2 = vector.load %arg2[%c0_2, %c0_3, %c0_4, %c0_5] : memref<1x8x16x4xf32, #tpu.memory_space<vmem>>, vector<1x8x16x4xf32>
    %3 = vector.shape_cast %2 : vector<1x8x16x4xf32> to vector<8x16x4xf32>
    %c1 = arith.constant 1 : index
    %c1_6 = arith.constant 1 : index
    %c0_7 = arith.constant 0 : index
    %4 = vector.load %arg9[%c1, %c1_6, %c0_7] : memref<10x18x128xf32, #tpu.memory_space<vmem>>, vector<8x16x4xf32>
    tpu.vector_store %arg9[%c1, %c1_6, %c0_7], %3 {strides = array<i32>} : memref<10x18x128xf32, #tpu.memory_space<vmem>>, vector<8x16x4xf32>,
    %c0_i32 = arith.constant 0 : i32
    %5 = arith.cmpi sgt, %arg1, %c0_i32 : i32
    %c0_8 = arith.constant 0 : index
    %c0_9 = arith.constant 0 : index
    %c0_10 = arith.constant 0 : index
    %c0_11 = arith.constant 0 : index
    %6 = vector.load %arg3[%c0_8, %c0_9, %c0_10, %c0_11] : memref<1x1x16x4xf32, #tpu.memory_space<vmem>>, vector<1x1x16x4xf32>
    %7 = vector.shape_cast %6 : vector<1x1x16x4xf32> to vector<1x16x4xf32>
    %cst_12 = arith.constant 0.000000e+00 : f32
    %8 = vector.broadcast %cst_12 : f32 to vector<1x16x4xf32>
    %9 = arith.select %5, %7, %8 : vector<1x16x4xf32>
    %c0_13 = arith.constant 0 : index
    %c1_14 = arith.constant 1 : index
    %c0_15 = arith.constant 0 : index
    %10 = vector.load %arg9[%c0_13, %c1_14, %c0_15] : memref<10x18x128xf32, #tpu.memory_space<vmem>>, vector<1x16x4xf32>
    tpu.vector_store %arg9[%c0_13, %c1_14, %c0_15], %9 {strides = array<i32>} : memref<10x18x128xf32, #tpu.memory_space<vmem>>, vector<1x16x4xf32>,
    %c1_i32 = arith.constant 1 : i32
    %11 = arith.cmpi slt, %arg1, %c1_i32 : i32
    %c0_16 = arith.constant 0 : index
    %c0_17 = arith.constant 0 : index
    %c0_18 = arith.constant 0 : index
    %c0_19 = arith.constant 0 : index
    %12 = vector.load %arg4[%c0_16, %c0_17, %c0_18, %c0_19] : memref<1x1x16x4xf32, #tpu.memory_space<vmem>>, vector<1x1x16x4xf32>
    %13 = vector.shape_cast %12 : vector<1x1x16x4xf32> to vector<1x16x4xf32>
    %cst_20 = arith.constant 0.000000e+00 : f32
    %14 = vector.broadcast %cst_20 : f32 to vector<1x16x4xf32>
    %15 = arith.select %11, %13, %14 : vector<1x16x4xf32>
    %c9 = arith.constant 9 : index
    %c1_21 = arith.constant 1 : index
    %c0_22 = arith.constant 0 : index
    %16 = vector.load %arg9[%c9, %c1_21, %c0_22] : memref<10x18x128xf32, #tpu.memory_space<vmem>>, vector<1x16x4xf32>
    tpu.vector_store %arg9[%c9, %c1_21, %c0_22], %15 {strides = array<i32>} : memref<10x18x128xf32, #tpu.memory_space<vmem>>, vector<1x16x4xf32>,
    %c0_23 = arith.constant 0 : index
    %c0_24 = arith.constant 0 : index
    %c0_25 = arith.constant 0 : index
    %17 = vector.load %arg9[%c0_23, %c0_24, %c0_25] : memref<10x18x128xf32, #tpu.memory_space<vmem>>, vector<10x16x128xf32>
    %c0_26 = arith.constant 0 : index
    %c0_27 = arith.constant 0 : index
    %c0_28 = arith.constant 0 : index
    %18 = vector.load %arg10[%c0_26, %c0_27, %c0_28] : memref<10x16x384xf32, #tpu.memory_space<vmem>>, vector<10x16x128xf32>
    tpu.vector_store %arg10[%c0_26, %c0_27, %c0_28], %17 {strides = array<i32>} : memref<10x16x384xf32, #tpu.memory_space<vmem>>, vector<10x16x128xf32>,
    %c0_29 = arith.constant 0 : index
    %c1_30 = arith.constant 1 : index
    %c0_31 = arith.constant 0 : index
    %19 = vector.load %arg9[%c0_29, %c1_30, %c0_31] : memref<10x18x128xf32, #tpu.memory_space<vmem>>, vector<10x16x128xf32>
    %c0_32 = arith.constant 0 : index
    %c0_33 = arith.constant 0 : index
    %c128 = arith.constant 128 : index
    %20 = vector.load %arg10[%c0_32, %c0_33, %c128] : memref<10x16x384xf32, #tpu.memory_space<vmem>>, vector<10x16x128xf32>
    tpu.vector_store %arg10[%c0_32, %c0_33, %c128], %19 {strides = array<i32>} : memref<10x16x384xf32, #tpu.memory_space<vmem>>, vector<10x16x128xf32>,
    %c0_34 = arith.constant 0 : index
    %c2 = arith.constant 2 : index
    %c0_35 = arith.constant 0 : index
    %21 = vector.load %arg9[%c0_34, %c2, %c0_35] : memref<10x18x128xf32, #tpu.memory_space<vmem>>, vector<10x16x128xf32>
    %c0_36 = arith.constant 0 : index
    %c0_37 = arith.constant 0 : index
    %c256 = arith.constant 256 : index
    %22 = vector.load %arg10[%c0_36, %c0_37, %c256] : memref<10x16x384xf32, #tpu.memory_space<vmem>>, vector<10x16x128xf32>
    tpu.vector_store %arg10[%c0_36, %c0_37, %c256], %21 {strides = array<i32>} : memref<10x16x384xf32, #tpu.memory_space<vmem>>, vector<10x16x128xf32>,
    %cst_38 = arith.constant 0.000000e+00 : f32
    %23 = vector.broadcast %cst_38 : f32 to vector<128x128xf32>
    %c0_39 = arith.constant 0 : index
    %c0_40 = arith.constant 0 : index
    %c0_41 = arith.constant 0 : index
    %24 = vector.load %arg10[%c0_39, %c0_40, %c0_41] : memref<10x16x384xf32, #tpu.memory_space<vmem>>, vector<8x16x384xf32>
    %25 = vector.shape_cast %24 : vector<8x16x384xf32> to vector<128x384xf32>
    %c0_42 = arith.constant 0 : index
    %c0_43 = arith.constant 0 : index
    %c0_44 = arith.constant 0 : index
    %26 = vector.load %arg5[%c0_42, %c0_43, %c0_44] : memref<3x384x128xf32, #tpu.memory_space<vmem>>, vector<1x384x128xf32>
    %27 = vector.shape_cast %26 : vector<1x384x128xf32> to vector<384x128xf32>
    %cst_45 = arith.constant dense<0.000000e+00> : vector<128x128xf32>
    %28 = tpu.matmul %25, %27, %cst_45 {dimension_numbers = #tpu.dot_dimension_numbers<[1], [0], [0], [1], [0, 0, 1, 1], [], []>} : vector<128x384xf32>, vector<384x128xf32>, vector<128x128xf32> -> vector<128x128xf32>
    %29 = arith.addf %23, %28 : vector<128x128xf32>
    %c1_46 = arith.constant 1 : index
    %c0_47 = arith.constant 0 : index
    %c0_48 = arith.constant 0 : index
    %30 = vector.load %arg10[%c1_46, %c0_47, %c0_48] : memref<10x16x384xf32, #tpu.memory_space<vmem>>, vector<8x16x384xf32>
    %31 = vector.shape_cast %30 : vector<8x16x384xf32> to vector<128x384xf32>
    %c1_49 = arith.constant 1 : index
    %c0_50 = arith.constant 0 : index
    %c0_51 = arith.constant 0 : index
    %32 = vector.load %arg5[%c1_49, %c0_50, %c0_51] : memref<3x384x128xf32, #tpu.memory_space<vmem>>, vector<1x384x128xf32>
    %33 = vector.shape_cast %32 : vector<1x384x128xf32> to vector<384x128xf32>
    %cst_52 = arith.constant dense<0.000000e+00> : vector<128x128xf32>
    %34 = tpu.matmul %31, %33, %cst_52 {dimension_numbers = #tpu.dot_dimension_numbers<[1], [0], [0], [1], [0, 0, 1, 1], [], []>} : vector<128x384xf32>, vector<384x128xf32>, vector<128x128xf32> -> vector<128x128xf32>
    %35 = arith.addf %29, %34 : vector<128x128xf32>
    %c2_53 = arith.constant 2 : index
    %c0_54 = arith.constant 0 : index
    %c0_55 = arith.constant 0 : index
    %36 = vector.load %arg10[%c2_53, %c0_54, %c0_55] : memref<10x16x384xf32, #tpu.memory_space<vmem>>, vector<8x16x384xf32>
    %37 = vector.shape_cast %36 : vector<8x16x384xf32> to vector<128x384xf32>
    %c2_56 = arith.constant 2 : index
    %c0_57 = arith.constant 0 : index
    %c0_58 = arith.constant 0 : index
    %38 = vector.load %arg5[%c2_56, %c0_57, %c0_58] : memref<3x384x128xf32, #tpu.memory_space<vmem>>, vector<1x384x128xf32>
    %39 = vector.shape_cast %38 : vector<1x384x128xf32> to vector<384x128xf32>
    %cst_59 = arith.constant dense<0.000000e+00> : vector<128x128xf32>
    %40 = tpu.matmul %37, %39, %cst_59 {dimension_numbers = #tpu.dot_dimension_numbers<[1], [0], [0], [1], [0, 0, 1, 1], [], []>} : vector<128x384xf32>, vector<384x128xf32>, vector<128x128xf32> -> vector<128x128xf32>
    %41 = arith.addf %35, %40 : vector<128x128xf32>
    %c0_60 = arith.constant 0 : index
    %c0_61 = arith.constant 0 : index
    %42 = vector.load %arg6[%c0_60, %c0_61] : memref<1x128xf32, #tpu.memory_space<vmem>>, vector<1x128xf32>
    %43 = vector.broadcast %42 : vector<1x128xf32> to vector<128x128xf32>
    %44 = arith.addf %41, %43 : vector<128x128xf32>
    %45 = vector.shape_cast %44 : vector<128x128xf32> to vector<8x16x128xf32>
    %c0_62 = arith.constant 0 : index
    %c0_63 = arith.constant 0 : index
    %c0_64 = arith.constant 0 : index
    %c0_65 = arith.constant 0 : index
    %46 = vector.load %arg7[%c0_62, %c0_63, %c0_64, %c0_65] : memref<1x8x16x128xf32, #tpu.memory_space<vmem>>, vector<1x8x16x128xf32>
    %47 = vector.shape_cast %46 : vector<1x8x16x128xf32> to vector<8x16x128xf32>
    %48 = vector.shape_cast %45 : vector<8x16x128xf32> to vector<1x8x16x128xf32>
    tpu.vector_store %arg7[%c0_62, %c0_63, %c0_64, %c0_65], %48 {strides = array<i32>} : memref<1x8x16x128xf32, #tpu.memory_space<vmem>>, vector<1x8x16x128xf32>,
    %49 = arith.mulf %44, %44 : vector<128x128xf32>
    %50 = vector.shape_cast %44 : vector<128x128xf32> to vector<16x8x128xf32>
    %cst_66 = arith.constant dense<0.000000e+00> : vector<8x128xf32>
    %51 = vector.multi_reduction <add>, %50, %cst_66 [0] : vector<16x8x128xf32> to vector<8x128xf32>
    %52 = vector.shape_cast %49 : vector<128x128xf32> to vector<16x8x128xf32>
    %cst_67 = arith.constant dense<0.000000e+00> : vector<8x128xf32>
    %53 = vector.multi_reduction <add>, %52, %cst_67 [0] : vector<16x8x128xf32> to vector<8x128xf32>
    %cst_68 = arith.constant dense<0.000000e+00> : vector<128xf32>
    %54 = vector.multi_reduction <add>, %51, %cst_68 [0] : vector<8x128xf32> to vector<128xf32>
    %55 = vector.shape_cast %54 : vector<128xf32> to vector<1x128xf32>
    %cst_69 = arith.constant dense<0.000000e+00> : vector<128xf32>
    %56 = vector.multi_reduction <add>, %53, %cst_69 [0] : vector<8x128xf32> to vector<128xf32>
    %57 = vector.shape_cast %56 : vector<128xf32> to vector<1x128xf32>
    %c0_70 = arith.constant 0 : index
    %c0_71 = arith.constant 0 : index
    %c0_72 = arith.constant 0 : index
    %c0_73 = arith.constant 0 : index
    %58 = vector.load %arg8[%c0_70, %c0_71, %c0_72, %c0_73] : memref<1x1x2x128xf32, #tpu.memory_space<vmem>>, vector<1x1x1x128xf32>
    %59 = vector.shape_cast %58 : vector<1x1x1x128xf32> to vector<1x128xf32>
    %60 = vector.shape_cast %55 : vector<1x128xf32> to vector<1x1x1x128xf32>
    tpu.vector_store %arg8[%c0_70, %c0_71, %c0_72, %c0_73], %60 {strides = array<i32>} : memref<1x1x2x128xf32, #tpu.memory_space<vmem>>, vector<1x1x1x128xf32>,
    %c0_74 = arith.constant 0 : index
    %c0_75 = arith.constant 0 : index
    %c1_76 = arith.constant 1 : index
    %c0_77 = arith.constant 0 : index
    %61 = vector.load %arg8[%c0_74, %c0_75, %c1_76, %c0_77] : memref<1x1x2x128xf32, #tpu.memory_space<vmem>>, vector<1x1x1x128xf32>
    %62 = vector.shape_cast %61 : vector<1x1x1x128xf32> to vector<1x128xf32>
    %63 = vector.shape_cast %57 : vector<1x128xf32> to vector<1x1x1x128xf32>
    tpu.vector_store %arg8[%c0_74, %c0_75, %c1_76, %c0_77], %63 {strides = array<i32>} : memref<1x1x2x128xf32, #tpu.memory_space<vmem>>, vector<1x1x1x128xf32>,
    return
  }
  func.func @transform_0(%arg0: i32, %arg1: i32) -> (i32, i32, i32, i32) {
    %c0_i32 = arith.constant 0 : i32
    %c0_i32_0 = arith.constant 0 : i32
    %c0_i32_1 = arith.constant 0 : i32
    return %arg0, %arg1, %c0_i32, %c0_i32_0 : i32, i32, i32, i32
  }
  func.func @transform_1(%arg0: i32, %arg1: i32) -> (i32, i32, i32, i32) {
    %c8_i32 = arith.constant 8 : i32
    %0 = arith.muli %arg1, %c8_i32 : i32
    %c1_i32 = arith.constant 1 : i32
    %1 = arith.subi %0, %c1_i32 : i32
    %c0_i32 = arith.constant 0 : i32
    %2 = arith.maxsi %1, %c0_i32 : i32
    %c0_i32_0 = arith.constant 0 : i32
    %c0_i32_1 = arith.constant 0 : i32
    %c0_i32_2 = arith.constant 0 : i32
    return %arg0, %2, %c0_i32_0, %c0_i32_1 : i32, i32, i32, i32
  }
  func.func @transform_2(%arg0: i32, %arg1: i32) -> (i32, i32, i32, i32) {
    %c1_i32 = arith.constant 1 : i32
    %0 = arith.addi %arg1, %c1_i32 : i32
    %c8_i32 = arith.constant 8 : i32
    %1 = arith.muli %0, %c8_i32 : i32
    %c15_i32 = arith.constant 15 : i32
    %2 = arith.minsi %1, %c15_i32 : i32
    %c0_i32 = arith.constant 0 : i32
    %c0_i32_0 = arith.constant 0 : i32
    %c0_i32_1 = arith.constant 0 : i32
    return %arg0, %2, %c0_i32, %c0_i32_0 : i32, i32, i32, i32
  }
  func.func @transform_3(%arg0: i32, %arg1: i32) -> (i32, i32, i32) {
    %c0_i32 = arith.constant 0 : i32
    %c0_i32_0 = arith.constant 0 : i32
    %c0_i32_1 = arith.constant 0 : i32
    %c0_i32_2 = arith.constant 0 : i32
    return %c0_i32, %c0_i32_0, %c0_i32_1 : i32, i32, i32
  }
  func.func @transform_4(%arg0: i32, %arg1: i32) -> (i32, i32) {
    %c0_i32 = arith.constant 0 : i32
    %c0_i32_0 = arith.constant 0 : i32
    %c0_i32_1 = arith.constant 0 : i32
    return %c0_i32, %c0_i32_0 : i32, i32
  }
  func.func @transform_5(%arg0: i32, %arg1: i32) -> (i32, i32, i32, i32) {
    %c0_i32 = arith.constant 0 : i32
    %c0_i32_0 = arith.constant 0 : i32
    %c0_i32_1 = arith.constant 0 : i32
    return %arg0, %arg1, %c0_i32, %c0_i32_0 : i32, i32, i32, i32
  }
  func.func @transform_6(%arg0: i32, %arg1: i32) -> (i32, i32, i32, i32) {
    %c0_i32 = arith.constant 0 : i32
    %c0_i32_0 = arith.constant 0 : i32
    %c0_i32_1 = arith.constant 0 : i32
    return %arg0, %arg1, %c0_i32, %c0_i32_0 : i32, i32, i32, i32
  }
}

</mosaic_0001>

<llo_original>
// kernel: tpu_custom_call.1
$region0: #{tpu_custom_call.1}
  #allocation0 [shape = 'u32[]', space=smem, size = 0x4, offset = 0x4, fixed_abs, tag = 'smem constant byte address 0x4 - core index']
  #allocation1 [shape = 'u32[144,128]{1,0:T(1,128)}', space=vmem, size = 0x12000, scoped, tag = 'internal scratch']
  #allocation2 [shape = 'f32[10,18,128]{2,1,0:T(8,128)}', space=vmem, size = 0x1e000, scoped, tag = 'scratch operand']
  #allocation3 [shape = 'f32[10,16,384]{2,1,0:T(8,128)}', space=vmem, size = 0x3c000, scoped, tag = 'scratch operand']
  %s0 = inlined_call_operand.vmem [shape: f32[2,16,16,4], index: 0, kind: input, shape index: {}]
  %s1 = inlined_call_operand.vmem [shape: f32[2,16,16,4], index: 1, kind: input, shape index: {}]
  %s2 = inlined_call_operand.vmem [shape: f32[2,16,16,4], index: 2, kind: input, shape index: {}]
  %s3 = inlined_call_operand.vmem [shape: f32[3,384,128], index: 3, kind: input, shape index: {}]
  %s4 = inlined_call_operand.vmem [shape: f32[1,128], index: 4, kind: input, shape index: {}]
  %s5 = inlined_call_operand.hbm [shape: f32[2,16,16,128], index: 5, kind: output, shape index: {0}]
  %s6 = inlined_call_operand.hbm [shape: f32[2,2,2,128], index: 6, kind: output, shape index: {1}]
  %7 = xla_tuple %s5, %s6
  %s8 = sld [smem:[#allocation0]]
  $region61: #{tpu_custom_call.1} parent=0
    _
  %s10 = ssub.s32 1, %s8
  %s11 = scalar_select 0, %s10, %s8
  $region1: #{tpu_custom_call.1} parent=0
    #allocation4 [shape = 'u8[131072]{0}', space=vmem, size = 0x20000, scoped, tag = 'output window, operand 0']
    #allocation5 [shape = 's32[2]{0}', space=sflag, size = 0x8, scoped, tag = 'scoped memory for tpu_custom_call.1']
    #allocation6 [shape = 'u8[2048]{0}', space=vmem, size = 0x800, scoped, tag = 'output window, operand 1']
    #allocation7 [shape = 's32[2]{0}', space=sflag, size = 0x8, scoped, tag = 'scoped memory for tpu_custom_call.1']
    %12 = vsyncpa [#allocation5], 0
    %s13 = scalar_lea.sflag [#allocation5], 1
    %14 = vsyncpa %s13, 0
    %15 = vsyncpa [#allocation7], 0
    %s16 = scalar_lea.sflag [#allocation7], 1
    %17 = vsyncpa %s16, 0
    loop: start=0, step=1, limit=6
    $region2: #{tpu_custom_call.1} parent=1 // loop_pre_header
      _
    $region3: #{tpu_custom_call.1} parent=1 // loop_header
      %s19 = sphi 0, %s23
      %p20 = scmp.ge.s32.totalorder %s19, 6
      %s26 = sphi 0, %s38
      %s27 = sphi 0, %s34
      %s28 = sphi 0, %s26
      %s29 = sphi 0, %s27
      %s30 = sphi 0, %s28
      %s31 = sphi 0, %s29
      %s43 = sphi 0, %s45
      %s46 = sphi 0, %s43
      %s47 = sphi 0, %s46
      %s63 = sphi 0, %s47
      %s79 = sphi 0, %s81
      %s82 = sphi 0, %s79
      %s83 = sphi 0, %s82
      %s99 = sphi 0, %s83
      %s115 = sphi 0, %s117
      %s118 = sphi 0, %s115
      %s119 = sphi 0, %s118
      %s135 = sphi 0, %s119
      %s139 = sphi 0, %s139
      %s141 = sphi 0, %s139
      %s142 = sphi 0, %s141
      %s156 = sphi 0, %s142
      %s160 = sphi 0, %s160
      %s162 = sphi 0, %s160
      %s163 = sphi 0, %s162
      %s177 = sphi 0, %s163
      %s185 = sphi 0, %s187
      %s188 = sphi 0, %s185
      %s189 = sphi 0, %s188
      %s205 = sphi 0, %s189
      %s213 = sphi 0, %s215
      %s216 = sphi 0, %s213
      %s217 = sphi 0, %s216
      %s233 = sphi 0, %s217
    $region4: #{tpu_custom_call.1} parent=1 // loop_header_branch
      %22 = sbr.rel (%p20) target = $region8
    $region5: #{tpu_custom_call.1} parent=1 // loop_body
      %s24 = ssub.s32 %s19, 1
      %s25 = ssub.s32 %s19, 2
      %s32 = sadd.s32 1, %s27
      %p33 = scmp.ge.s32.totalorder %s32, 2
      %s34 = scalar_select %p33, 0, %s32
      %s35 = sadd.s32 1, %s26
      %s36 = scalar_select %p33, %s35, %s26
      %p37 = scmp.ge.s32.totalorder %s36, 2
      %s38 = scalar_select %p37, 0, %s36
      %s39 = ssub.s32 %s26, %s38
      %s40 = ssub.s32 %s27, %s34
      %s41 = sor.u32 %s39, %s40
      %p42 = scmp.eq.s32.totalorder %s41, 0
      %s44 = sadd.s32 %s43, 1
      %s45 = scalar_select %p42, %s43, %s44
      %p48 = pneg %p42
      %p49 = scmp.eq.s32.totalorder %s19, 3
      %p50 = por %p48, %p49
      %p51 = scmp.ne.s32.totalorder %s43, %s46
      %p52 = scmp.eq.s32.totalorder %s19, 0
      %p53 = por %p51, %p52
      %p54 = scmp.ne.s32.totalorder %s43, %s46
      %p55 = scmp.eq.s32.totalorder %s24, 3
      %p56 = por %p54, %p55
      %p57 = scmp.ne.s32.totalorder %s46, %s47
      %p58 = scmp.eq.s32.totalorder %s24, 0
      %p59 = por %p57, %p58
      %p60 = scmp.ne.s32.totalorder %s46, %s47
      %p61 = scmp.eq.s32.totalorder %s25, 3
      %p62 = por %p60, %p61
      %p64 = scmp.ne.s32.totalorder %s47, %s63
      %p65 = scmp.eq.s32.totalorder %s25, 0
      %p66 = por %p64, %p65
      %s67 = smul.u32 %s27, 8
      %s68 = ssub.s32 %s67, 1
      %p69 = scmp.gt.s32.totalorder %s68, 0
      %s70 = scalar_select %p69, %s68, 0
      %s71 = smul.u32 %s34, 8
      %s72 = ssub.s32 %s71, 1
      %p73 = scmp.gt.s32.totalorder %s72, 0
      %s74 = scalar_select %p73, %s72, 0
      %s75 = ssub.s32 %s26, %s38
      %s76 = ssub.s32 %s70, %s74
      %s77 = sor.u32 %s75, %s76
      %p78 = scmp.eq.s32.totalorder %s77, 0
      %s80 = sadd.s32 %s79, 1
      %s81 = scalar_select %p78, %s79, %s80
      %p84 = pneg %p78
      %p85 = scmp.eq.s32.totalorder %s19, 3
      %p86 = por %p84, %p85
      %p87 = scmp.ne.s32.totalorder %s79, %s82
      %p88 = scmp.eq.s32.totalorder %s19, 0
      %p89 = por %p87, %p88
      %p90 = scmp.ne.s32.totalorder %s79, %s82
      %p91 = scmp.eq.s32.totalorder %s24, 3
      %p92 = por %p90, %p91
      %p93 = scmp.ne.s32.totalorder %s82, %s83
      %p94 = scmp.eq.s32.totalorder %s24, 0
      %p95 = por %p93, %p94
      %p96 = scmp.ne.s32.totalorder %s82, %s83
      %p97 = scmp.eq.s32.totalorder %s25, 3
      %p98 = por %p96, %p97
      %p100 = scmp.ne.s32.totalorder %s83, %s99
      %p101 = scmp.eq.s32.totalorder %s25, 0
      %p102 = por %p100, %p101
      %s103 = sadd.s32 %s27, 1
      %s104 = smul.u32 %s103, 8
      %p105 = scmp.lt.s32.totalorder %s104, 15
      %s106 = scalar_select %p105, %s104, 15
      %s107 = sadd.s32 %s34, 1
      %s108 = smul.u32 %s107, 8
      %p109 = scmp.lt.s32.totalorder %s108, 15
      %s110 = scalar_select %p109, %s108, 15
      %s111 = ssub.s32 %s26, %s38
      %s112 = ssub.s32 %s106, %s110
      %s113 = sor.u32 %s111, %s112
      %p114 = scmp.eq.s32.totalorder %s113, 0
      %s116 = sadd.s32 %s115, 1
      %s117 = scalar_select %p114, %s115, %s116
      %p120 = pneg %p114
      %p121 = scmp.eq.s32.totalorder %s19, 3
      %p122 = por %p120, %p121
      %p123 = scmp.ne.s32.totalorder %s115, %s118
      %p124 = scmp.eq.s32.totalorder %s19, 0
      %p125 = por %p123, %p124
      %p126 = scmp.ne.s32.totalorder %s115, %s118
      %p127 = scmp.eq.s32.totalorder %s24, 3
      %p128 = por %p126, %p127
      %p129 = scmp.ne.s32.totalorder %s118, %s119
      %p130 = scmp.eq.s32.totalorder %s24, 0
      %p131 = por %p129, %p130
      %p132 = scmp.ne.s32.totalorder %s118, %s119
      %p133 = scmp.eq.s32.totalorder %s25, 3
      %p134 = por %p132, %p133
      %p136 = scmp.ne.s32.totalorder %s119, %s135
      %p137 = scmp.eq.s32.totalorder %s25, 0
      %p138 = por %p136, %p137
      %s140 = sadd.s32 %s139, 1
      %p143 = scmp.eq.s32.totalorder %s19, 3
      %p144 = scmp.ne.s32.totalorder %s139, %s141
      %p145 = scmp.eq.s32.totalorder %s19, 0
      %p146 = por %p144, %p145
      %p147 = scmp.ne.s32.totalorder %s139, %s141
      %p148 = scmp.eq.s32.totalorder %s24, 3
      %p149 = por %p147, %p148
      %p150 = scmp.ne.s32.totalorder %s141, %s142
      %p151 = scmp.eq.s32.totalorder %s24, 0
      %p152 = por %p150, %p151
      %p153 = scmp.ne.s32.totalorder %s141, %s142
      %p154 = scmp.eq.s32.totalorder %s25, 3
      %p155 = por %p153, %p154
      %p157 = scmp.ne.s32.totalorder %s142, %s156
      %p158 = scmp.eq.s32.totalorder %s25, 0
      %p159 = por %p157, %p158
      %s161 = sadd.s32 %s160, 1
      %p164 = scmp.eq.s32.totalorder %s19, 3
      %p165 = scmp.ne.s32.totalorder %s160, %s162
      %p166 = scmp.eq.s32.totalorder %s19, 0
      %p167 = por %p165, %p166
      %p168 = scmp.ne.s32.totalorder %s160, %s162
      %p169 = scmp.eq.s32.totalorder %s24, 3
      %p170 = por %p168, %p169
      %p171 = scmp.ne.s32.totalorder %s162, %s163
      %p172 = scmp.eq.s32.totalorder %s24, 0
      %p173 = por %p171, %p172
      %p174 = scmp.ne.s32.totalorder %s162, %s163
      %p175 = scmp.eq.s32.totalorder %s25, 3
      %p176 = por %p174, %p175
      %p178 = scmp.ne.s32.totalorder %s163, %s177
      %p179 = scmp.eq.s32.totalorder %s25, 0
      %p180 = por %p178, %p179
      %s181 = ssub.s32 %s26, %s38
      %s182 = ssub.s32 %s27, %s34
      %s183 = sor.u32 %s181, %s182
      %p184 = scmp.eq.s32.totalorder %s183, 0
      %s186 = sadd.s32 %s185, 1
      %s187 = scalar_select %p184, %s185, %s186
      %p190 = pneg %p184
      %p191 = scmp.eq.s32.totalorder %s19, 3
      %p192 = por %p190, %p191
      %p193 = scmp.ne.s32.totalorder %s185, %s188
      %p194 = scmp.eq.s32.totalorder %s19, 0
      %p195 = por %p193, %p194
      %p196 = scmp.ne.s32.totalorder %s185, %s188
      %p197 = scmp.eq.s32.totalorder %s24, 3
      %p198 = por %p196, %p197
      %p199 = scmp.ne.s32.totalorder %s188, %s189
      %p200 = scmp.eq.s32.totalorder %s24, 0
      %p201 = por %p199, %p200
      %p202 = scmp.ne.s32.totalorder %s188, %s189
      %p203 = scmp.eq.s32.totalorder %s25, 3
      %p204 = por %p202, %p203
      %p206 = scmp.ne.s32.totalorder %s189, %s205
      %p207 = scmp.eq.s32.totalorder %s25, 0
      %p208 = por %p206, %p207
      %s209 = ssub.s32 %s26, %s38
      %s210 = ssub.s32 %s27, %s34
      %s211 = sor.u32 %s209, %s210
      %p212 = scmp.eq.s32.totalorder %s211, 0
      %s214 = sadd.s32 %s213, 1
      %s215 = scalar_select %p212, %s213, %s214
      %p218 = pneg %p212
      %p219 = scmp.eq.s32.totalorder %s19, 3
      %p220 = por %p218, %p219
      %p221 = scmp.ne.s32.totalorder %s213, %s216
      %p222 = scmp.eq.s32.totalorder %s19, 0
      %p223 = por %p221, %p222
      %p224 = scmp.ne.s32.totalorder %s213, %s216
      %p225 = scmp.eq.s32.totalorder %s24, 3
      %p226 = por %p224, %p225
      %p227 = scmp.ne.s32.totalorder %s216, %s217
      %p228 = scmp.eq.s32.totalorder %s24, 0
      %p229 = por %p227, %p228
      %p230 = scmp.ne.s32.totalorder %s216, %s217
      %p231 = scmp.eq.s32.totalorder %s25, 3
      %p232 = por %p230, %p231
      %p234 = scmp.ne.s32.totalorder %s217, %s233
      %p235 = scmp.eq.s32.totalorder %s25, 0
      %p236 = por %p234, %p235
      %p237 = scmp.le.s32.totalorder 1, %s19
      %p238 = scmp.lt.s32.totalorder %s19, 5
      %p239 = pnand %p237, %p238
      %p240 = pneg %p239
      // Predicated region
      $region9: #{tpu_custom_call.1} parent=5 // pred_check
        _
      $region10: #{tpu_custom_call.1} parent=5 // pred_check_branch
        %242 = sbr.rel (%p239) target = $region12
      $region11: #{tpu_custom_call.1} parent=5 // pred_region
        %s243 = ssub.s32 %s19, 1
        // Predicated region
        $region13: #{tpu_custom_call.1} parent=11 // pred_check
          %p244 = pneg %p152
        $region14: #{tpu_custom_call.1} parent=11 // pred_check_branch
          %246 = sbr.rel (%p244) target = $region16
        $region15: #{tpu_custom_call.1} parent=11 // pred_region
          _
        $region16: #{tpu_custom_call.1} parent=11 // pred_fallthru
          _
        // Predicated region
        $region17: #{tpu_custom_call.1} parent=11 // pred_check
          %p247 = pneg %p173
        $region18: #{tpu_custom_call.1} parent=11 // pred_check_branch
          %249 = sbr.rel (%p247) target = $region20
        $region19: #{tpu_custom_call.1} parent=11 // pred_region
          _
        $region20: #{tpu_custom_call.1} parent=11 // pred_fallthru
          _
      $region12: #{tpu_custom_call.1} parent=5 // pred_fallthru
        _
      %p250 = scmp.lt.s32.totalorder %s19, 4
      // Predicated region
      $region21: #{tpu_custom_call.1} parent=5 // pred_check
        %p251 = pneg %p250
      $region22: #{tpu_custom_call.1} parent=5 // pred_check_branch
        %253 = sbr.rel (%p251) target = $region24
      $region23: #{tpu_custom_call.1} parent=5 // pred_region
        // Predicated region
        $region25: #{tpu_custom_call.1} parent=23 // pred_check
          %p254 = pneg %p53
        $region26: #{tpu_custom_call.1} parent=23 // pred_check_branch
          %256 = sbr.rel (%p254) target = $region28
        $region27: #{tpu_custom_call.1} parent=23 // pred_region
          %s257 = smul.u32 8, %s27
          %p258 = scmp.lt.s32.totalorder %s26, 1
          %s259 = scalar_select %p258, %s26, 1
          %p260 = scmp.lt.s32.totalorder %s257, 15
          %s261 = scalar_select %p260, %s257, 15
          %s262 = smul.addr %s261, 2
          %s263 = smul.addr %s259, 32
          %s264 = sadd.s32 %s262, %s263
          %s265 = smul.addr %s264, 8
          %s266 = scalar_lea.vmem %s0, %s265
          %s267 = smul.u32 8, %s27
        $region28: #{tpu_custom_call.1} parent=23 // pred_fallthru
          _
        // Predicated region
        $region29: #{tpu_custom_call.1} parent=23 // pred_check
          %p268 = pneg %p89
        $region30: #{tpu_custom_call.1} parent=23 // pred_check_branch
          %270 = sbr.rel (%p268) target = $region32
        $region31: #{tpu_custom_call.1} parent=23 // pred_region
          %s271 = smul.u32 %s27, 8
          %s272 = ssub.s32 %s271, 1
          %p273 = scmp.gt.s32.totalorder %s272, 0
          %s274 = scalar_select %p273, %s272, 0
          %p275 = scmp.lt.s32.totalorder %s26, 1
          %s276 = scalar_select %p275, %s26, 1
          %p277 = scmp.lt.s32.totalorder %s274, 15
          %s278 = scalar_select %p277, %s274, 15
          %s279 = smul.addr %s278, 2
          %s280 = smul.addr %s276, 32
          %s281 = sadd.s32 %s279, %s280
          %s282 = smul.addr %s281, 8
          %s283 = scalar_lea.vmem %s1, %s282
          %s284 = smul.u32 %s27, 8
          %s285 = ssub.s32 %s284, 1
          %p286 = scmp.gt.s32.totalorder %s285, 0
          %s287 = scalar_select %p286, %s285, 0
        $region32: #{tpu_custom_call.1} parent=23 // pred_fallthru
          _
        // Predicated region
        $region33: #{tpu_custom_call.1} parent=23 // pred_check
          %p288 = pneg %p125
        $region34: #{tpu_custom_call.1} parent=23 // pred_check_branch
          %290 = sbr.rel (%p288) target = $region36
        $region35: #{tpu_custom_call.1} parent=23 // pred_region
          %s291 = sadd.s32 %s27, 1
          %s292 = smul.u32 %s291, 8
          %p293 = scmp.lt.s32.totalorder %s292, 15
          %s294 = scalar_select %p293, %s292, 15
          %p295 = scmp.lt.s32.totalorder %s26, 1
          %s296 = scalar_select %p295, %s26, 1
          %p297 = scmp.lt.s32.totalorder %s294, 15
          %s298 = scalar_select %p297, %s294, 15
          %s299 = smul.addr %s298, 2
          %s300 = smul.addr %s296, 32
          %s301 = sadd.s32 %s299, %s300
          %s302 = smul.addr %s301, 8
          %s303 = scalar_lea.vmem %s2, %s302
          %s304 = sadd.s32 %s27, 1
          %s305 = smul.u32 %s304, 8
          %p306 = scmp.lt.s32.totalorder %s305, 15
          %s307 = scalar_select %p306, %s305, 15
        $region36: #{tpu_custom_call.1} parent=23 // pred_fallthru
          _
      $region24: #{tpu_custom_call.1} parent=5 // pred_fallthru
        _
      %p308 = scmp.le.s32.totalorder 1, %s19
      %p309 = scmp.lt.s32.totalorder %s19, 5
      %p310 = pnand %p308, %p309
      %p311 = pneg %p310
      // Predicated region
      $region37: #{tpu_custom_call.1} parent=5 // pred_check
        _
      $region38: #{tpu_custom_call.1} parent=5 // pred_check_branch
        %313 = sbr.rel (%p310) target = $region40
      $region39: #{tpu_custom_call.1} parent=5 // pred_region
        %s314 = ssub.s32 %s19, 1
        %s315 = smul.u32 8, %s29
        %p316 = scmp.lt.s32.totalorder %s28, 1
        %s317 = scalar_select %p316, %s28, 1
        %p318 = scmp.lt.s32.totalorder %s315, 15
        %s319 = scalar_select %p318, %s315, 15
        %s320 = smul.addr %s319, 2
        %s321 = smul.addr %s317, 32
        %s322 = sadd.s32 %s320, %s321
        %s323 = smul.addr %s322, 8
        %s324 = scalar_lea.vmem %s0, %s323
        %p325 = pneg %p59
        %p326 = pneg %p56
        %s327 = smul.u32 %s29, 8
        %s328 = ssub.s32 %s327, 1
        %p329 = scmp.gt.s32.totalorder %s328, 0
        %s330 = scalar_select %p329, %s328, 0
        %p331 = scmp.lt.s32.totalorder %s28, 1
        %s332 = scalar_select %p331, %s28, 1
        %p333 = scmp.lt.s32.totalorder %s330, 15
        %s334 = scalar_select %p333, %s330, 15
        %s335 = smul.addr %s334, 2
        %s336 = smul.addr %s332, 32
        %s337 = sadd.s32 %s335, %s336
        %s338 = smul.addr %s337, 8
        %s339 = scalar_lea.vmem %s1, %s338
        %p340 = pneg %p95
        %p341 = pneg %p92
        %s342 = sadd.s32 %s29, 1
        %s343 = smul.u32 %s342, 8
        %p344 = scmp.lt.s32.totalorder %s343, 15
        %s345 = scalar_select %p344, %s343, 15
        %p346 = scmp.lt.s32.totalorder %s28, 1
        %s347 = scalar_select %p346, %s28, 1
        %p348 = scmp.lt.s32.totalorder %s345, 15
        %s349 = scalar_select %p348, %s345, 15
        %s350 = smul.addr %s349, 2
        %s351 = smul.addr %s347, 32
        %s352 = sadd.s32 %s350, %s351
        %s353 = smul.addr %s352, 8
        %s354 = scalar_lea.vmem %s2, %s353
        %p355 = pneg %p131
        %p356 = pneg %p128
        %p357 = pneg %p152
        %p358 = pneg %p149
        %p359 = pneg %p173
        %p360 = pneg %p170
        %p361 = pneg %p201
        %p362 = pneg %p198
        %s363 = sand.u32 %s188, 1
        %s364 = scalar_lea.sflag [#allocation5], %s363
        %s365 = sand.u32 %s188, 1
        %s366 = smul.addr %s365, 128
        %s367 = scalar_lea.vmem [#allocation4], %s366
        %p368 = pneg %p229
        %p369 = pneg %p226
        %s370 = sand.u32 %s216, 1
        %s371 = scalar_lea.sflag [#allocation7], %s370
        %s372 = sand.u32 %s216, 1
        %s373 = smul.addr %s372, 2
        %s374 = scalar_lea.vmem [#allocation6], %s373
        %s375 = smul.u32 8, %s29
        %p376 = scmp.lt.s32.totalorder %s28, 1
        %s377 = scalar_select %p376, %s28, 1
        %p378 = scmp.lt.s32.totalorder %s375, 15
        %s379 = scalar_select %p378, %s375, 15
        %s380 = smul.addr %s379, 2
        %s381 = smul.addr %s377, 32
        %s382 = sadd.s32 %s380, %s381
        %s383 = smul.addr %s382, 8
        %s384 = scalar_lea.vmem %s0, %s383
        %s385 = smul.u32 8, %s29
        %s386 = smul.u32 %s29, 8
        %s387 = ssub.s32 %s386, 1
        %p388 = scmp.gt.s32.totalorder %s387, 0
        %s389 = scalar_select %p388, %s387, 0
        %p390 = scmp.lt.s32.totalorder %s28, 1
        %s391 = scalar_select %p390, %s28, 1
        %p392 = scmp.lt.s32.totalorder %s389, 15
        %s393 = scalar_select %p392, %s389, 15
        %s394 = smul.addr %s393, 2
        %s395 = smul.addr %s391, 32
        %s396 = sadd.s32 %s394, %s395
        %s397 = smul.addr %s396, 8
        %s398 = scalar_lea.vmem %s1, %s397
        %s399 = smul.u32 %s29, 8
        %s400 = ssub.s32 %s399, 1
        %p401 = scmp.gt.s32.totalorder %s400, 0
        %s402 = scalar_select %p401, %s400, 0
        %s403 = sadd.s32 %s29, 1
        %s404 = smul.u32 %s403, 8
        %p405 = scmp.lt.s32.totalorder %s404, 15
        %s406 = scalar_select %p405, %s404, 15
        %p407 = scmp.lt.s32.totalorder %s28, 1
        %s408 = scalar_select %p407, %s28, 1
        %p409 = scmp.lt.s32.totalorder %s406, 15
        %s410 = scalar_select %p409, %s406, 15
        %s411 = smul.addr %s410, 2
        %s412 = smul.addr %s408, 32
        %s413 = sadd.s32 %s411, %s412
        %s414 = smul.addr %s413, 8
        %s415 = scalar_lea.vmem %s2, %s414
        %s416 = sadd.s32 %s29, 1
        %s417 = smul.u32 %s416, 8
        %p418 = scmp.lt.s32.totalorder %s417, 15
        %s419 = scalar_select %p418, %s417, 15
        %s420 = smul.u32 8, %s29
        %421 = vst [vmem:[#allocation2] sm:$0xff] 0.0
        %422 = vst [vmem:[#allocation2 + $0x8] sm:$0xff] 0.0
        %423 = vst [vmem:[#allocation2 + $0x10] sm:$0x3] 0.0
        %424 = vst [vmem:[#allocation2 + $0x18] sm:$0xff] 0.0
        %425 = vst [vmem:[#allocation2 + $0x20] sm:$0xff] 0.0
        %426 = vst [vmem:[#allocation2 + $0x28] sm:$0x3] 0.0
        %427 = vst [vmem:[#allocation2 + $0x30] sm:$0xff] 0.0
        %428 = vst [vmem:[#allocation2 + $0x38] sm:$0xff] 0.0
        %429 = vst [vmem:[#allocation2 + $0x40] sm:$0x3] 0.0
        %430 = vst [vmem:[#allocation2 + $0x48] sm:$0xff] 0.0
        %431 = vst [vmem:[#allocation2 + $0x50] sm:$0xff] 0.0
        %432 = vst [vmem:[#allocation2 + $0x58] sm:$0x3] 0.0
        %433 = vst [vmem:[#allocation2 + $0x60] sm:$0xff] 0.0
        %434 = vst [vmem:[#allocation2 + $0x68] sm:$0xff] 0.0
        %435 = vst [vmem:[#allocation2 + $0x70] sm:$0x3] 0.0
        %436 = vst [vmem:[#allocation2 + $0x78] sm:$0xff] 0.0
        %437 = vst [vmem:[#allocation2 + $0x80] sm:$0xff] 0.0
        %438 = vst [vmem:[#allocation2 + $0x88] sm:$0x3] 0.0
        %439 = vst [vmem:[#allocation2 + $0x90] sm:$0xff] 0.0
        %440 = vst [vmem:[#allocation2 + $0x98] sm:$0xff] 0.0
        %441 = vst [vmem:[#allocation2 + $0xa0] sm:$0x3] 0.0
        %442 = vst [vmem:[#allocation2 + $0xa8] sm:$0xff] 0.0
        %443 = vst [vmem:[#allocation2 + $0xb0] sm:$0xff] 0.0
        %444 = vst [vmem:[#allocation2 + $0xb8] sm:$0x3] 0.0
        %445 = vst [vmem:[#allocation2 + $0xc0] sm:$0xff] 0.0
        %446 = vst [vmem:[#allocation2 + $0xc8] sm:$0xff] 0.0
        %447 = vst [vmem:[#allocation2 + $0xd0] sm:$0x3] 0.0
        %448 = vst [vmem:[#allocation2 + $0xd8] sm:$0xff] 0.0
        %449 = vst [vmem:[#allocation2 + $0xe0] sm:$0xff] 0.0
        %450 = vst [vmem:[#allocation2 + $0xe8] sm:$0x3] 0.0
        %v451 = vld [vmem:[%s384] sm:$0xff]
        %v452 = vld [vmem:[%s384 + $0x8] sm:$0xff]
        %v453 = vld [vmem:[%s384 + $0x10] sm:$0xff]
        %v454 = vld [vmem:[%s384 + $0x18] sm:$0xff]
        %v455 = vld [vmem:[%s384 + $0x20] sm:$0xff]
        %v456 = vld [vmem:[%s384 + $0x28] sm:$0xff]
        %v457 = vld [vmem:[%s384 + $0x30] sm:$0xff]
        %v458 = vld [vmem:[%s384 + $0x38] sm:$0xff]
        %v459 = vld [vmem:[%s384 + $0x40] sm:$0xff]
        %v460 = vld [vmem:[%s384 + $0x48] sm:$0xff]
        %v461 = vld [vmem:[%s384 + $0x50] sm:$0xff]
        %v462 = vld [vmem:[%s384 + $0x58] sm:$0xff]
        %v463 = vld [vmem:[%s384 + $0x60] sm:$0xff]
        %v464 = vld [vmem:[%s384 + $0x68] sm:$0xff]
        %v465 = vld [vmem:[%s384 + $0x70] sm:$0xff]
        %v466 = vld [vmem:[%s384 + $0x78] sm:$0xff]
        %s467 = scalar_lea.vmem [#allocation2], 24
        %vm468 = vcmask 31744
        %469 = vst.msk [vmem:[%s467 + $0x1] sm:$0xff] %vm468, %v451
        %470 = vst.msk [vmem:[%s467 + $0x9] sm:$0xff] %vm468, %v452
        %471 = vst.msk [vmem:[%s467 + $0x19] sm:$0xff] %vm468, %v453
        %472 = vst.msk [vmem:[%s467 + $0x21] sm:$0xff] %vm468, %v454
        %473 = vst.msk [vmem:[%s467 + $0x31] sm:$0xff] %vm468, %v455
        %474 = vst.msk [vmem:[%s467 + $0x39] sm:$0xff] %vm468, %v456
        %475 = vst.msk [vmem:[%s467 + $0x49] sm:$0xff] %vm468, %v457
        %476 = vst.msk [vmem:[%s467 + $0x51] sm:$0xff] %vm468, %v458
        %477 = vst.msk [vmem:[%s467 + $0x61] sm:$0xff] %vm468, %v459
        %478 = vst.msk [vmem:[%s467 + $0x69] sm:$0xff] %vm468, %v460
        %479 = vst.msk [vmem:[%s467 + $0x79] sm:$0xff] %vm468, %v461
        %480 = vst.msk [vmem:[%s467 + $0x81] sm:$0xff] %vm468, %v462
        %481 = vst.msk [vmem:[%s467 + $0x91] sm:$0xff] %vm468, %v463
        %482 = vst.msk [vmem:[%s467 + $0x99] sm:$0xff] %vm468, %v464
        %483 = vst.msk [vmem:[%s467 + $0xa9] sm:$0xff] %vm468, %v465
        %484 = vst.msk [vmem:[%s467 + $0xb1] sm:$0xff] %vm468, %v466
        %p485 = scmp.gt.s32.totalorder %s29, 0
        %v486 = vld [vmem:[%s398] sm:$0xff]
        %v487 = vld [vmem:[%s398 + $0x8] sm:$0xff]
        %s488 = scalar_select %p485, 1, 0
        %v489 = vstv %s488
        %vm490 = vcmp.eq.s32.totalorder %v489, 1
        %v491 = vsel %vm490, %v486, 0.0
        %v492 = vsel %vm490, %v487, 0.0
        %493 = vst.msk [vmem:[#allocation2 + $0x1] sm:$0xff] %vm468, %v491
        %494 = vst.msk [vmem:[#allocation2 + $0x9] sm:$0xff] %vm468, %v492
        %p495 = scmp.lt.s32.totalorder %s29, 1
        %v496 = vld [vmem:[%s415] sm:$0xff]
        %v497 = vld [vmem:[%s415 + $0x8] sm:$0xff]
        %s498 = scalar_select %p495, 1, 0
        %v499 = vstv %s498
        %vm500 = vcmp.eq.s32.totalorder %v499, 1
        %v501 = vsel %vm500, %v496, 0.0
        %v502 = vsel %vm500, %v497, 0.0
        %s503 = scalar_lea.vmem [#allocation2], 216
        %504 = vst.msk [vmem:[%s503 + $0x1] sm:$0xff] %vm468, %v501
        %505 = vst.msk [vmem:[%s503 + $0x9] sm:$0xff] %vm468, %v502
        %v506 = vld [vmem:[#allocation2] sm:$0xff]
        %v507 = vld [vmem:[#allocation2 + $0x8] sm:$0xff]
        %v508 = vld [vmem:[#allocation2 + $0x18] sm:$0xff]
        %v509 = vld [vmem:[#allocation2 + $0x20] sm:$0xff]
        %v510 = vld [vmem:[#allocation2 + $0x30] sm:$0xff]
        %v511 = vld [vmem:[#allocation2 + $0x38] sm:$0xff]
        %v512 = vld [vmem:[#allocation2 + $0x48] sm:$0xff]
        %v513 = vld [vmem:[#allocation2 + $0x50] sm:$0xff]
        %v514 = vld [vmem:[#allocation2 + $0x60] sm:$0xff]
        %v515 = vld [vmem:[#allocation2 + $0x68] sm:$0xff]
        %v516 = vld [vmem:[#allocation2 + $0x78] sm:$0xff]
        %v517 = vld [vmem:[#allocation2 + $0x80] sm:$0xff]
        %v518 = vld [vmem:[#allocation2 + $0x90] sm:$0xff]
        %v519 = vld [vmem:[#allocation2 + $0x98] sm:$0xff]
        %v520 = vld [vmem:[#allocation2 + $0xa8] sm:$0xff]
        %v521 = vld [vmem:[#allocation2 + $0xb0] sm:$0xff]
        %v522 = vld [vmem:[#allocation2 + $0xc0] sm:$0xff]
        %v523 = vld [vmem:[#allocation2 + $0xc8] sm:$0xff]
        %v524 = vld [vmem:[#allocation2 + $0xd8] sm:$0xff]
        %v525 = vld [vmem:[#allocation2 + $0xe0] sm:$0xff]
        %526 = vst [vmem:[#allocation3] sm:$0xff] %v506
        %527 = vst [vmem:[#allocation3 + $0x18] sm:$0xff] %v507
        %528 = vst [vmem:[#allocation3 + $0x30] sm:$0xff] %v508
        %529 = vst [vmem:[#allocation3 + $0x48] sm:$0xff] %v509
        %530 = vst [vmem:[#allocation3 + $0x60] sm:$0xff] %v510
        %531 = vst [vmem:[#allocation3 + $0x78] sm:$0xff] %v511
        %532 = vst [vmem:[#allocation3 + $0x90] sm:$0xff] %v512
        %533 = vst [vmem:[#allocation3 + $0xa8] sm:$0xff] %v513
        %534 = vst [vmem:[#allocation3 + $0xc0] sm:$0xff] %v514
        %535 = vst [vmem:[#allocation3 + $0xd8] sm:$0xff] %v515
        %536 = vst [vmem:[#allocation3 + $0xf0] sm:$0xff] %v516
        %537 = vst [vmem:[#allocation3 + $0x108] sm:$0xff] %v517
        %538 = vst [vmem:[#allocation3 + $0x120] sm:$0xff] %v518
        %539 = vst [vmem:[#allocation3 + $0x138] sm:$0xff] %v519
        %540 = vst [vmem:[#allocation3 + $0x150] sm:$0xff] %v520
        %541 = vst [vmem:[#allocation3 + $0x168] sm:$0xff] %v521
        %542 = vst [vmem:[#allocation3 + $0x180] sm:$0xff] %v522
        %543 = vst [vmem:[#allocation3 + $0x198] sm:$0xff] %v523
        %544 = vst [vmem:[#allocation3 + $0x1b0] sm:$0xff] %v524
        %545 = vst [vmem:[#allocation3 + $0x1c8] sm:$0xff] %v525
        %v546 = vld [vmem:[#allocation2 + $0x1] sm:$0xff]
        %v547 = vld [vmem:[#allocation2 + $0x9] sm:$0xff]
        %v548 = vld [vmem:[#allocation2 + $0x19] sm:$0xff]
        %v549 = vld [vmem:[#allocation2 + $0x21] sm:$0xff]
        %v550 = vld [vmem:[#allocation2 + $0x31] sm:$0xff]
        %v551 = vld [vmem:[#allocation2 + $0x39] sm:$0xff]
        %v552 = vld [vmem:[#allocation2 + $0x49] sm:$0xff]
        %v553 = vld [vmem:[#allocation2 + $0x51] sm:$0xff]
        %v554 = vld [vmem:[#allocation2 + $0x61] sm:$0xff]
        %v555 = vld [vmem:[#allocation2 + $0x69] sm:$0xff]
        %v556 = vld [vmem:[#allocation2 + $0x79] sm:$0xff]
        %v557 = vld [vmem:[#allocation2 + $0x81] sm:$0xff]
        %v558 = vld [vmem:[#allocation2 + $0x91] sm:$0xff]
        %v559 = vld [vmem:[#allocation2 + $0x99] sm:$0xff]
        %v560 = vld [vmem:[#allocation2 + $0xa9] sm:$0xff]
        %v561 = vld [vmem:[#allocation2 + $0xb1] sm:$0xff]
        %v562 = vld [vmem:[#allocation2 + $0xc1] sm:$0xff]
        %v563 = vld [vmem:[#allocation2 + $0xc9] sm:$0xff]
        %v564 = vld [vmem:[#allocation2 + $0xd9] sm:$0xff]
        %v565 = vld [vmem:[#allocation2 + $0xe1] sm:$0xff]
        %566 = vst [vmem:[#allocation3 + $0x8] sm:$0xff] %v546
        %567 = vst [vmem:[#allocation3 + $0x20] sm:$0xff] %v547
        %568 = vst [vmem:[#allocation3 + $0x38] sm:$0xff] %v548
        %569 = vst [vmem:[#allocation3 + $0x50] sm:$0xff] %v549
        %570 = vst [vmem:[#allocation3 + $0x68] sm:$0xff] %v550
        %571 = vst [vmem:[#allocation3 + $0x80] sm:$0xff] %v551
        %572 = vst [vmem:[#allocation3 + $0x98] sm:$0xff] %v552
        %573 = vst [vmem:[#allocation3 + $0xb0] sm:$0xff] %v553
        %574 = vst [vmem:[#allocation3 + $0xc8] sm:$0xff] %v554
        %575 = vst [vmem:[#allocation3 + $0xe0] sm:$0xff] %v555
        %576 = vst [vmem:[#allocation3 + $0xf8] sm:$0xff] %v556
        %577 = vst [vmem:[#allocation3 + $0x110] sm:$0xff] %v557
        %578 = vst [vmem:[#allocation3 + $0x128] sm:$0xff] %v558
        %579 = vst [vmem:[#allocation3 + $0x140] sm:$0xff] %v559
        %580 = vst [vmem:[#allocation3 + $0x158] sm:$0xff] %v560
        %581 = vst [vmem:[#allocation3 + $0x170] sm:$0xff] %v561
        %582 = vst [vmem:[#allocation3 + $0x188] sm:$0xff] %v562
        %583 = vst [vmem:[#allocation3 + $0x1a0] sm:$0xff] %v563
        %584 = vst [vmem:[#allocation3 + $0x1b8] sm:$0xff] %v564
        %585 = vst [vmem:[#allocation3 + $0x1d0] sm:$0xff] %v565
        %v586 = vld [vmem:[#allocation2 + $0x2] sm:$0xff]
        %v587 = vld [vmem:[#allocation2 + $0xa] sm:$0xff]
        %v588 = vld [vmem:[#allocation2 + $0x1a] sm:$0xff]
        %v589 = vld [vmem:[#allocation2 + $0x22] sm:$0xff]
        %v590 = vld [vmem:[#allocation2 + $0x32] sm:$0xff]
        %v591 = vld [vmem:[#allocation2 + $0x3a] sm:$0xff]
        %v592 = vld [vmem:[#allocation2 + $0x4a] sm:$0xff]
        %v593 = vld [vmem:[#allocation2 + $0x52] sm:$0xff]
        %v594 = vld [vmem:[#allocation2 + $0x62] sm:$0xff]
        %v595 = vld [vmem:[#allocation2 + $0x6a] sm:$0xff]
        %v596 = vld [vmem:[#allocation2 + $0x7a] sm:$0xff]
        %v597 = vld [vmem:[#allocation2 + $0x82] sm:$0xff]
        %v598 = vld [vmem:[#allocation2 + $0x92] sm:$0xff]
        %v599 = vld [vmem:[#allocation2 + $0x9a] sm:$0xff]
        %v600 = vld [vmem:[#allocation2 + $0xaa] sm:$0xff]
        %v601 = vld [vmem:[#allocation2 + $0xb2] sm:$0xff]
        %v602 = vld [vmem:[#allocation2 + $0xc2] sm:$0xff]
        %v603 = vld [vmem:[#allocation2 + $0xca] sm:$0xff]
        %v604 = vld [vmem:[#allocation2 + $0xda] sm:$0xff]
        %v605 = vld [vmem:[#allocation2 + $0xe2] sm:$0xff]
        %606 = vst [vmem:[#allocation3 + $0x10] sm:$0xff] %v586
        %607 = vst [vmem:[#allocation3 + $0x28] sm:$0xff] %v587
        %608 = vst [vmem:[#allocation3 + $0x40] sm:$0xff] %v588
        %609 = vst [vmem:[#allocation3 + $0x58] sm:$0xff] %v589
        %610 = vst [vmem:[#allocation3 + $0x70] sm:$0xff] %v590
        %611 = vst [vmem:[#allocation3 + $0x88] sm:$0xff] %v591
        %612 = vst [vmem:[#allocation3 + $0xa0] sm:$0xff] %v592
        %613 = vst [vmem:[#allocation3 + $0xb8] sm:$0xff] %v593
        %614 = vst [vmem:[#allocation3 + $0xd0] sm:$0xff] %v594
        %615 = vst [vmem:[#allocation3 + $0xe8] sm:$0xff] %v595
        %616 = vst [vmem:[#allocation3 + $0x100] sm:$0xff] %v596
        %617 = vst [vmem:[#allocation3 + $0x118] sm:$0xff] %v597
        %618 = vst [vmem:[#allocation3 + $0x130] sm:$0xff] %v598
        %619 = vst [vmem:[#allocation3 + $0x148] sm:$0xff] %v599
        %620 = vst [vmem:[#allocation3 + $0x160] sm:$0xff] %v600
        %621 = vst [vmem:[#allocation3 + $0x178] sm:$0xff] %v601
        %622 = vst [vmem:[#allocation3 + $0x190] sm:$0xff] %v602
        %623 = vst [vmem:[#allocation3 + $0x1a8] sm:$0xff] %v603
        %624 = vst [vmem:[#allocation3 + $0x1c0] sm:$0xff] %v604
        %625 = vst [vmem:[#allocation3 + $0x1d8] sm:$0xff] %v605
        %v626 = vld [vmem:[#allocation3] sm:$0xff]
        %v627 = vld [vmem:[#allocation3 + $0x8] sm:$0xff]
        %v628 = vld [vmem:[#allocation3 + $0x10] sm:$0xff]
        %v629 = vld [vmem:[#allocation3 + $0x18] sm:$0xff]
        %v630 = vld [vmem:[#allocation3 + $0x20] sm:$0xff]
        %v631 = vld [vmem:[#allocation3 + $0x28] sm:$0xff]
        %v632 = vld [vmem:[#allocation3 + $0x30] sm:$0xff]
        %v633 = vld [vmem:[#allocation3 + $0x38] sm:$0xff]
        %v634 = vld [vmem:[#allocation3 + $0x40] sm:$0xff]
        %v635 = vld [vmem:[#allocation3 + $0x48] sm:$0xff]
        %v636 = vld [vmem:[#allocation3 + $0x50] sm:$0xff]
        %v637 = vld [vmem:[#allocation3 + $0x58] sm:$0xff]
        %v638 = vld [vmem:[#allocation3 + $0x60] sm:$0xff]
        %v639 = vld [vmem:[#allocation3 + $0x68] sm:$0xff]
        %v640 = vld [vmem:[#allocation3 + $0x70] sm:$0xff]
        %v641 = vld [vmem:[#allocation3 + $0x78] sm:$0xff]
        %v642 = vld [vmem:[#allocation3 + $0x80] sm:$0xff]
        %v643 = vld [vmem:[#allocation3 + $0x88] sm:$0xff]
        %v644 = vld [vmem:[#allocation3 + $0x90] sm:$0xff]
        %v645 = vld [vmem:[#allocation3 + $0x98] sm:$0xff]
        %v646 = vld [vmem:[#allocation3 + $0xa0] sm:$0xff]
        %v647 = vld [vmem:[#allocation3 + $0xa8] sm:$0xff]
        %v648 = vld [vmem:[#allocation3 + $0xb0] sm:$0xff]
        %v649 = vld [vmem:[#allocation3 + $0xb8] sm:$0xff]
        %v650 = vld [vmem:[#allocation3 + $0xc0] sm:$0xff]
        %v651 = vld [vmem:[#allocation3 + $0xc8] sm:$0xff]
        %v652 = vld [vmem:[#allocation3 + $0xd0] sm:$0xff]
        %v653 = vld [vmem:[#allocation3 + $0xd8] sm:$0xff]
        %v654 = vld [vmem:[#allocation3 + $0xe0] sm:$0xff]
        %v655 = vld [vmem:[#allocation3 + $0xe8] sm:$0xff]
        %v656 = vld [vmem:[#allocation3 + $0xf0] sm:$0xff]
        %v657 = vld [vmem:[#allocation3 + $0xf8] sm:$0xff]
        %v658 = vld [vmem:[#allocation3 + $0x100] sm:$0xff]
        %v659 = vld [vmem:[#allocation3 + $0x108] sm:$0xff]
        %v660 = vld [vmem:[#allocation3 + $0x110] sm:$0xff]
        %v661 = vld [vmem:[#allocation3 + $0x118] sm:$0xff]
        %v662 = vld [vmem:[#allocation3 + $0x120] sm:$0xff]
        %v663 = vld [vmem:[#allocation3 + $0x128] sm:$0xff]
        %v664 = vld [vmem:[#allocation3 + $0x130] sm:$0xff]
        %v665 = vld [vmem:[#allocation3 + $0x138] sm:$0xff]
        %v666 = vld [vmem:[#allocation3 + $0x140] sm:$0xff]
        %v667 = vld [vmem:[#allocation3 + $0x148] sm:$0xff]
        %v668 = vld [vmem:[#allocation3 + $0x150] sm:$0xff]
        %v669 = vld [vmem:[#allocation3 + $0x158] sm:$0xff]
        %v670 = vld [vmem:[#allocation3 + $0x160] sm:$0xff]
        %v671 = vld [vmem:[#allocation3 + $0x168] sm:$0xff]
        %v672 = vld [vmem:[#allocation3 + $0x170] sm:$0xff]
        %v673 = vld [vmem:[#allocation3 + $0x178] sm:$0xff]
        %v674 = vld [vmem:[%s3] sm:$0xff]
        %v675 = vld [vmem:[%s3 + $0x8] sm:$0xff]
        %v676 = vld [vmem:[%s3 + $0x10] sm:$0xff]
        %v677 = vld [vmem:[%s3 + $0x18] sm:$0xff]
        %v678 = vld [vmem:[%s3 + $0x20] sm:$0xff]
        %v679 = vld [vmem:[%s3 + $0x28] sm:$0xff]
        %v680 = vld [vmem:[%s3 + $0x30] sm:$0xff]
        %v681 = vld [vmem:[%s3 + $0x38] sm:$0xff]
        %v682 = vld [vmem:[%s3 + $0x40] sm:$0xff]
        %v683 = vld [vmem:[%s3 + $0x48] sm:$0xff]
        %v684 = vld [vmem:[%s3 + $0x50] sm:$0xff]
        %v685 = vld [vmem:[%s3 + $0x58] sm:$0xff]
        %v686 = vld [vmem:[%s3 + $0x60] sm:$0xff]
        %v687 = vld [vmem:[%s3 + $0x68] sm:$0xff]
        %v688 = vld [vmem:[%s3 + $0x70] sm:$0xff]
        %v689 = vld [vmem:[%s3 + $0x78] sm:$0xff]
        %v690 = vld [vmem:[%s3 + $0x80] sm:$0xff]
        %v691 = vld [vmem:[%s3 + $0x88] sm:$0xff]
        %v692 = vld [vmem:[%s3 + $0x90] sm:$0xff]
        %v693 = vld [vmem:[%s3 + $0x98] sm:$0xff]
        %v694 = vld [vmem:[%s3 + $0xa0] sm:$0xff]
        %v695 = vld [vmem:[%s3 + $0xa8] sm:$0xff]
        %v696 = vld [vmem:[%s3 + $0xb0] sm:$0xff]
        %v697 = vld [vmem:[%s3 + $0xb8] sm:$0xff]
        %v698 = vld [vmem:[%s3 + $0xc0] sm:$0xff]
        %v699 = vld [vmem:[%s3 + $0xc8] sm:$0xff]
        %v700 = vld [vmem:[%s3 + $0xd0] sm:$0xff]
        %v701 = vld [vmem:[%s3 + $0xd8] sm:$0xff]
        %v702 = vld [vmem:[%s3 + $0xe0] sm:$0xff]
        %v703 = vld [vmem:[%s3 + $0xe8] sm:$0xff]
        %v704 = vld [vmem:[%s3 + $0xf0] sm:$0xff]
        %v705 = vld [vmem:[%s3 + $0xf8] sm:$0xff]
        %v706 = vld [vmem:[%s3 + $0x100] sm:$0xff]
        %v707 = vld [vmem:[%s3 + $0x108] sm:$0xff]
        %v708 = vld [vmem:[%s3 + $0x110] sm:$0xff]
        %v709 = vld [vmem:[%s3 + $0x118] sm:$0xff]
        %v710 = vld [vmem:[%s3 + $0x120] sm:$0xff]
        %v711 = vld [vmem:[%s3 + $0x128] sm:$0xff]
        %v712 = vld [vmem:[%s3 + $0x130] sm:$0xff]
        %v713 = vld [vmem:[%s3 + $0x138] sm:$0xff]
        %v714 = vld [vmem:[%s3 + $0x140] sm:$0xff]
        %v715 = vld [vmem:[%s3 + $0x148] sm:$0xff]
        %v716 = vld [vmem:[%s3 + $0x150] sm:$0xff]
        %v717 = vld [vmem:[%s3 + $0x158] sm:$0xff]
        %v718 = vld [vmem:[%s3 + $0x160] sm:$0xff]
        %v719 = vld [vmem:[%s3 + $0x168] sm:$0xff]
        %v720 = vld [vmem:[%s3 + $0x170] sm:$0xff]
        %v721 = vld [vmem:[%s3 + $0x178] sm:$0xff]
        %s722 = scalar_lea.vmem [#allocation3], 48
        %v723 = vld [vmem:[%s722] sm:$0xff]
        %v724 = vld [vmem:[%s722 + $0x8] sm:$0xff]
        %v725 = vld [vmem:[%s722 + $0x10] sm:$0xff]
        %v726 = vld [vmem:[%s722 + $0x18] sm:$0xff]
        %v727 = vld [vmem:[%s722 + $0x20] sm:$0xff]
        %v728 = vld [vmem:[%s722 + $0x28] sm:$0xff]
        %v729 = vld [vmem:[%s722 + $0x30] sm:$0xff]
        %v730 = vld [vmem:[%s722 + $0x38] sm:$0xff]
        %v731 = vld [vmem:[%s722 + $0x40] sm:$0xff]
        %v732 = vld [vmem:[%s722 + $0x48] sm:$0xff]
        %v733 = vld [vmem:[%s722 + $0x50] sm:$0xff]
        %v734 = vld [vmem:[%s722 + $0x58] sm:$0xff]
        %v735 = vld [vmem:[%s722 + $0x60] sm:$0xff]
        %v736 = vld [vmem:[%s722 + $0x68] sm:$0xff]
        %v737 = vld [vmem:[%s722 + $0x70] sm:$0xff]
        %v738 = vld [vmem:[%s722 + $0x78] sm:$0xff]
        %v739 = vld [vmem:[%s722 + $0x80] sm:$0xff]
        %v740 = vld [vmem:[%s722 + $0x88] sm:$0xff]
        %v741 = vld [vmem:[%s722 + $0x90] sm:$0xff]
        %v742 = vld [vmem:[%s722 + $0x98] sm:$0xff]
        %v743 = vld [vmem:[%s722 + $0xa0] sm:$0xff]
        %v744 = vld [vmem:[%s722 + $0xa8] sm:$0xff]
        %v745 = vld [vmem:[%s722 + $0xb0] sm:$0xff]
        %v746 = vld [vmem:[%s722 + $0xb8] sm:$0xff]
        %v747 = vld [vmem:[%s722 + $0xc0] sm:$0xff]
        %v748 = vld [vmem:[%s722 + $0xc8] sm:$0xff]
        %v749 = vld [vmem:[%s722 + $0xd0] sm:$0xff]
        %v750 = vld [vmem:[%s722 + $0xd8] sm:$0xff]
        %v751 = vld [vmem:[%s722 + $0xe0] sm:$0xff]
        %v752 = vld [vmem:[%s722 + $0xe8] sm:$0xff]
        %v753 = vld [vmem:[%s722 + $0xf0] sm:$0xff]
        %v754 = vld [vmem:[%s722 + $0xf8] sm:$0xff]
        %v755 = vld [vmem:[%s722 + $0x100] sm:$0xff]
        %v756 = vld [vmem:[%s722 + $0x108] sm:$0xff]
        %v757 = vld [vmem:[%s722 + $0x110] sm:$0xff]
        %v758 = vld [vmem:[%s722 + $0x118] sm:$0xff]
        %v759 = vld [vmem:[%s722 + $0x120] sm:$0xff]
        %v760 = vld [vmem:[%s722 + $0x128] sm:$0xff]
        %v761 = vld [vmem:[%s722 + $0x130] sm:$0xff]
        %v762 = vld [vmem:[%s722 + $0x138] sm:$0xff]
        %v763 = vld [vmem:[%s722 + $0x140] sm:$0xff]
        %v764 = vld [vmem:[%s722 + $0x148] sm:$0xff]
        %v765 = vld [vmem:[%s722 + $0x150] sm:$0xff]
        %v766 = vld [vmem:[%s722 + $0x158] sm:$0xff]
        %v767 = vld [vmem:[%s722 + $0x160] sm:$0xff]
        %v768 = vld [vmem:[%s722 + $0x168] sm:$0xff]
        %v769 = vld [vmem:[%s722 + $0x170] sm:$0xff]
        %v770 = vld [vmem:[%s722 + $0x178] sm:$0xff]
        %s771 = scalar_lea.vmem %s3, 384
        %v772 = vld [vmem:[%s771] sm:$0xff]
        %v773 = vld [vmem:[%s771 + $0x8] sm:$0xff]
        %v774 = vld [vmem:[%s771 + $0x10] sm:$0xff]
        %v775 = vld [vmem:[%s771 + $0x18] sm:$0xff]
        %v776 = vld [vmem:[%s771 + $0x20] sm:$0xff]
        %v777 = vld [vmem:[%s771 + $0x28] sm:$0xff]
        %v778 = vld [vmem:[%s771 + $0x30] sm:$0xff]
        %v779 = vld [vmem:[%s771 + $0x38] sm:$0xff]
        %v780 = vld [vmem:[%s771 + $0x40] sm:$0xff]
        %v781 = vld [vmem:[%s771 + $0x48] sm:$0xff]
        %v782 = vld [vmem:[%s771 + $0x50] sm:$0xff]
        %v783 = vld [vmem:[%s771 + $0x58] sm:$0xff]
        %v784 = vld [vmem:[%s771 + $0x60] sm:$0xff]
        %v785 = vld [vmem:[%s771 + $0x68] sm:$0xff]
        %v786 = vld [vmem:[%s771 + $0x70] sm:$0xff]
        %v787 = vld [vmem:[%s771 + $0x78] sm:$0xff]
        %v788 = vld [vmem:[%s771 + $0x80] sm:$0xff]
        %v789 = vld [vmem:[%s771 + $0x88] sm:$0xff]
        %v790 = vld [vmem:[%s771 + $0x90] sm:$0xff]
        %v791 = vld [vmem:[%s771 + $0x98] sm:$0xff]
        %v792 = vld [vmem:[%s771 + $0xa0] sm:$0xff]
        %v793 = vld [vmem:[%s771 + $0xa8] sm:$0xff]
        %v794 = vld [vmem:[%s771 + $0xb0] sm:$0xff]
        %v795 = vld [vmem:[%s771 + $0xb8] sm:$0xff]
        %v796 = vld [vmem:[%s771 + $0xc0] sm:$0xff]
        %v797 = vld [vmem:[%s771 + $0xc8] sm:$0xff]
        %v798 = vld [vmem:[%s771 + $0xd0] sm:$0xff]
        %v799 = vld [vmem:[%s771 + $0xd8] sm:$0xff]
        %v800 = vld [vmem:[%s771 + $0xe0] sm:$0xff]
        %v801 = vld [vmem:[%s771 + $0xe8] sm:$0xff]
        %v802 = vld [vmem:[%s771 + $0xf0] sm:$0xff]
        %v803 = vld [vmem:[%s771 + $0xf8] sm:$0xff]
        %v804 = vld [vmem:[%s771 + $0x100] sm:$0xff]
        %v805 = vld [vmem:[%s771 + $0x108] sm:$0xff]
        %v806 = vld [vmem:[%s771 + $0x110] sm:$0xff]
        %v807 = vld [vmem:[%s771 + $0x118] sm:$0xff]
        %v808 = vld [vmem:[%s771 + $0x120] sm:$0xff]
        %v809 = vld [vmem:[%s771 + $0x128] sm:$0xff]
        %v810 = vld [vmem:[%s771 + $0x130] sm:$0xff]
        %v811 = vld [vmem:[%s771 + $0x138] sm:$0xff]
        %v812 = vld [vmem:[%s771 + $0x140] sm:$0xff]
        %v813 = vld [vmem:[%s771 + $0x148] sm:$0xff]
        %v814 = vld [vmem:[%s771 + $0x150] sm:$0xff]
        %v815 = vld [vmem:[%s771 + $0x158] sm:$0xff]
        %v816 = vld [vmem:[%s771 + $0x160] sm:$0xff]
        %v817 = vld [vmem:[%s771 + $0x168] sm:$0xff]
        %v818 = vld [vmem:[%s771 + $0x170] sm:$0xff]
        %v819 = vld [vmem:[%s771 + $0x178] sm:$0xff]
        %820 = vmatprep.subr.mxu0 0.0
        %821 = vmatpush1.msra.mxu0 %v787
        %822 = vmatprep.subr.mxu0 0.0
        %823 = vmatpush1.msra.mxu0 %v786
        %824 = vmatprep.subr.mxu0 0.0
        %825 = vmatpush1.msra.mxu0 %v785
        %826 = vmatprep.subr.mxu0 0.0
        %827 = vmatpush1.msra.mxu0 %v784
        %828 = vmatprep.subr.mxu0 0.0
        %829 = vmatpush1.msra.mxu0 %v783
        %830 = vmatprep.subr.mxu0 0.0
        %831 = vmatpush1.msra.mxu0 %v782
        %832 = vmatprep.subr.mxu0 0.0
        %833 = vmatpush1.msra.mxu0 %v781
        %834 = vmatprep.subr.mxu0 0.0
        %835 = vmatpush1.msra.mxu0 %v780
        %836 = vmatprep.subr.mxu0 0.0
        %837 = vmatpush1.msra.mxu0 %v779
        %838 = vmatprep.subr.mxu0 0.0
        %839 = vmatpush1.msra.mxu0 %v778
        %840 = vmatprep.subr.mxu0 0.0
        %841 = vmatpush1.msra.mxu0 %v777
        %842 = vmatprep.subr.mxu0 0.0
        %843 = vmatpush1.msra.mxu0 %v776
        %844 = vmatprep.subr.mxu0 0.0
        %845 = vmatpush1.msra.mxu0 %v775
        %846 = vmatprep.subr.mxu0 0.0
        %847 = vmatpush1.msra.mxu0 %v774
        %848 = vmatprep.subr.mxu0 0.0
        %849 = vmatpush1.msra.mxu0 %v773
        %850 = vmatprep.subr.mxu0 0.0
        %851 = vmatpush1.msra.mxu0 %v772
        %852 = vmatprep.subr.mxu0 0.0
        %853 = vmatpush2.msra.mxu0 %v803
        %854 = vmatprep.subr.mxu0 0.0
        %855 = vmatpush2.msra.mxu0 %v802
        %856 = vmatprep.subr.mxu0 0.0
        %857 = vmatpush2.msra.mxu0 %v801
        %858 = vmatprep.subr.mxu0 0.0
        %859 = vmatpush2.msra.mxu0 %v800
        %860 = vmatprep.subr.mxu0 0.0
        %861 = vmatpush2.msra.mxu0 %v799
        %862 = vmatprep.subr.mxu0 0.0
        %863 = vmatpush2.msra.mxu0 %v798
        %864 = vmatprep.subr.mxu0 0.0
        %865 = vmatpush2.msra.mxu0 %v797
        %866 = vmatprep.subr.mxu0 0.0
        %867 = vmatpush2.msra.mxu0 %v796
        %868 = vmatprep.subr.mxu0 0.0
        %869 = vmatpush2.msra.mxu0 %v795
        %870 = vmatprep.subr.mxu0 0.0
        %871 = vmatpush2.msra.mxu0 %v794
        %872 = vmatprep.subr.mxu0 0.0
        %873 = vmatpush2.msra.mxu0 %v793
        %874 = vmatprep.subr.mxu0 0.0
        %875 = vmatpush2.msra.mxu0 %v792
        %876 = vmatprep.subr.mxu0 0.0
        %877 = vmatpush2.msra.mxu0 %v791
        %878 = vmatprep.subr.mxu0 0.0
        %879 = vmatpush2.msra.mxu0 %v790
        %880 = vmatprep.subr.mxu0 0.0
        %881 = vmatpush2.msra.mxu0 %v789
        %882 = vmatprep.subr.mxu0 0.0
        %883 = vmatpush2.msra.mxu0 %v788
        %884 = vmatprep.mubr.f32.mxu0 %v724
        %885 = vmatmul.mubr.f32.gmra.mxu0 %v723
        %v886 = vpop.f32.mrf.mxu0
        %v887 = vadd.f32 0.0, %v886
        %v888 = vpop.f32.mrf.mxu0
        %889 = vmatprep.mubr.f32.mxu0 %v727
        %890 = vmatmul.mubr.f32.gmra.mxu0 %v726
        %v891 = vpop.f32.mrf.mxu0
        %v892 = vadd.f32 0.0, %v891
        %v893 = vpop.f32.mrf.mxu0
        %894 = vmatprep.mubr.f32.mxu0 %v730
        %895 = vmatmul.mubr.f32.gmra.mxu0 %v729
        %v896 = vpop.f32.mrf.mxu0
        %v897 = vadd.f32 0.0, %v896
        %v898 = vpop.f32.mrf.mxu0
        %899 = vmatprep.mubr.f32.mxu0 %v733
        %900 = vmatmul.mubr.f32.gmra.mxu0 %v732
        %v901 = vpop.f32.mrf.mxu0
        %v902 = vadd.f32 0.0, %v901
        %v903 = vpop.f32.mrf.mxu0
        %904 = vmatprep.mubr.f32.mxu0 %v736
        %905 = vmatmul.mubr.f32.gmra.mxu0 %v735
        %v906 = vpop.f32.mrf.mxu0
        %v907 = vadd.f32 0.0, %v906
        %v908 = vpop.f32.mrf.mxu0
        %909 = vmatprep.mubr.f32.mxu0 %v739
        %910 = vmatmul.mubr.f32.gmra.mxu0 %v738
        %v911 = vpop.f32.mrf.mxu0
        %v912 = vadd.f32 0.0, %v911
        %v913 = vpop.f32.mrf.mxu0
        %914 = vmatprep.mubr.f32.mxu0 %v742
        %915 = vmatmul.mubr.f32.gmra.mxu0 %v741
        %v916 = vpop.f32.mrf.mxu0
        %v917 = vadd.f32 0.0, %v916
        %v918 = vpop.f32.mrf.mxu0
        %919 = vmatprep.mubr.f32.mxu0 %v745
        %920 = vmatmul.mubr.f32.gmra.mxu0 %v744
        %v921 = vpop.f32.mrf.mxu0
        %v922 = vadd.f32 0.0, %v921
        %v923 = vpop.f32.mrf.mxu0
        %924 = vmatprep.mubr.f32.mxu0 %v748
        %925 = vmatmul.mubr.f32.gmra.mxu0 %v747
        %v926 = vpop.f32.mrf.mxu0
        %v927 = vadd.f32 0.0, %v926
        %v928 = vpop.f32.mrf.mxu0
        %929 = vmatprep.mubr.f32.mxu0 %v751
        %930 = vmatmul.mubr.f32.gmra.mxu0 %v750
        %v931 = vpop.f32.mrf.mxu0
        %v932 = vadd.f32 0.0, %v931
        %v933 = vpop.f32.mrf.mxu0
        %934 = vmatprep.mubr.f32.mxu0 %v754
        %935 = vmatmul.mubr.f32.gmra.mxu0 %v753
        %v936 = vpop.f32.mrf.mxu0
        %v937 = vadd.f32 0.0, %v936
        %v938 = vpop.f32.mrf.mxu0
        %939 = vmatprep.mubr.f32.mxu0 %v757
        %940 = vmatmul.mubr.f32.gmra.mxu0 %v756
        %v941 = vpop.f32.mrf.mxu0
        %v942 = vadd.f32 0.0, %v941
        %v943 = vpop.f32.mrf.mxu0
        %944 = vmatprep.mubr.f32.mxu0 %v760
        %945 = vmatmul.mubr.f32.gmra.mxu0 %v759
        %v946 = vpop.f32.mrf.mxu0
        %v947 = vadd.f32 0.0, %v946
        %v948 = vpop.f32.mrf.mxu0
        %949 = vmatprep.mubr.f32.mxu0 %v763
        %950 = vmatmul.mubr.f32.gmra.mxu0 %v762
        %v951 = vpop.f32.mrf.mxu0
        %v952 = vadd.f32 0.0, %v951
        %v953 = vpop.f32.mrf.mxu0
        %954 = vmatprep.mubr.f32.mxu0 %v766
        %955 = vmatmul.mubr.f32.gmra.mxu0 %v765
        %v956 = vpop.f32.mrf.mxu0
        %v957 = vadd.f32 0.0, %v956
        %v958 = vpop.f32.mrf.mxu0
        %959 = vmatprep.mubr.f32.mxu0 %v769
        %960 = vmatmul.mubr.f32.gmra.mxu0 %v768
        %v961 = vpop.f32.mrf.mxu0
        %v962 = vadd.f32 0.0, %v961
        %v963 = vpop.f32.mrf.mxu0
        %964 = vdwg.mxu0
        %965 = vmatprep.subr.mxu0 0.0
        %966 = vmatpush1.msra.mxu0 %v819
        %967 = vmatprep.subr.mxu0 0.0
        %968 = vmatpush1.msra.mxu0 %v818
        %969 = vmatprep.subr.mxu0 0.0
        %970 = vmatpush1.msra.mxu0 %v817
        %971 = vmatprep.subr.mxu0 0.0
        %972 = vmatpush1.msra.mxu0 %v816
        %973 = vmatprep.subr.mxu0 0.0
        %974 = vmatpush1.msra.mxu0 %v815
        %975 = vmatprep.subr.mxu0 0.0
        %976 = vmatpush1.msra.mxu0 %v814
        %977 = vmatprep.subr.mxu0 0.0
        %978 = vmatpush1.msra.mxu0 %v813
        %979 = vmatprep.subr.mxu0 0.0
        %980 = vmatpush1.msra.mxu0 %v812
        %981 = vmatprep.subr.mxu0 0.0
        %982 = vmatpush1.msra.mxu0 %v811
        %983 = vmatprep.subr.mxu0 0.0
        %984 = vmatpush1.msra.mxu0 %v810
        %985 = vmatprep.subr.mxu0 0.0
        %986 = vmatpush1.msra.mxu0 %v809
        %987 = vmatprep.subr.mxu0 0.0
        %988 = vmatpush1.msra.mxu0 %v808
        %989 = vmatprep.subr.mxu0 0.0
        %990 = vmatpush1.msra.mxu0 %v807
        %991 = vmatprep.subr.mxu0 0.0
        %992 = vmatpush1.msra.mxu0 %v806
        %993 = vmatprep.subr.mxu0 0.0
        %994 = vmatpush1.msra.mxu0 %v805
        %995 = vmatprep.subr.mxu0 0.0
        %996 = vmatpush1.msra.mxu0 %v804
        %997 = vmatprep.subr.mxu0 0.0
        %998 = vmatpush2.msra.mxu0 0.0
        %999 = vmatprep.subr.mxu0 0.0
        %1000 = vmatpush2.msra.mxu0 0.0
        %1001 = vmatprep.subr.mxu0 0.0
        %1002 = vmatpush2.msra.mxu0 0.0
        %1003 = vmatprep.subr.mxu0 0.0
        %1004 = vmatpush2.msra.mxu0 0.0
        %1005 = vmatprep.subr.mxu0 0.0
        %1006 = vmatpush2.msra.mxu0 0.0
        %1007 = vmatprep.subr.mxu0 0.0
        %1008 = vmatpush2.msra.mxu0 0.0
        %1009 = vmatprep.subr.mxu0 0.0
        %1010 = vmatpush2.msra.mxu0 0.0
        %1011 = vmatprep.subr.mxu0 0.0
        %1012 = vmatpush2.msra.mxu0 0.0
        %1013 = vmatprep.subr.mxu0 0.0
        %1014 = vmatpush2.msra.mxu0 0.0
        %1015 = vmatprep.subr.mxu0 0.0
        %1016 = vmatpush2.msra.mxu0 0.0
        %1017 = vmatprep.subr.mxu0 0.0
        %1018 = vmatpush2.msra.mxu0 0.0
        %1019 = vmatprep.subr.mxu0 0.0
        %1020 = vmatpush2.msra.mxu0 0.0
        %1021 = vmatprep.subr.mxu0 0.0
        %1022 = vmatpush2.msra.mxu0 0.0
        %1023 = vmatprep.subr.mxu0 0.0
        %1024 = vmatpush2.msra.mxu0 0.0
        %1025 = vmatprep.subr.mxu0 0.0
        %1026 = vmatpush2.msra.mxu0 0.0
        %1027 = vmatprep.subr.mxu0 0.0
        %1028 = vmatpush2.msra.mxu0 0.0
        %1029 = vmatprep.mubr.f32.mxu0 0.0
        %1030 = vmatmul.mubr.f32.gmra.mxu0 %v725
        %v1031 = vpop.f32.mrf.mxu0
        %v1032 = vadd.f32 %v887, %v1031
        %v1033 = vpop.f32.mrf.mxu0
        %1034 = vmatprep.mubr.f32.mxu0 0.0
        %1035 = vmatmul.mubr.f32.gmra.mxu0 %v728
        %v1036 = vpop.f32.mrf.mxu0
        %v1037 = vadd.f32 %v892, %v1036
        %v1038 = vpop.f32.mrf.mxu0
        %1039 = vmatprep.mubr.f32.mxu0 0.0
        %1040 = vmatmul.mubr.f32.gmra.mxu0 %v731
        %v1041 = vpop.f32.mrf.mxu0
        %v1042 = vadd.f32 %v897, %v1041
        %v1043 = vpop.f32.mrf.mxu0
        %1044 = vmatprep.mubr.f32.mxu0 0.0
        %1045 = vmatmul.mubr.f32.gmra.mxu0 %v734
        %v1046 = vpop.f32.mrf.mxu0
        %v1047 = vadd.f32 %v902, %v1046
        %v1048 = vpop.f32.mrf.mxu0
        %1049 = vmatprep.mubr.f32.mxu0 0.0
        %1050 = vmatmul.mubr.f32.gmra.mxu0 %v737
        %v1051 = vpop.f32.mrf.mxu0
        %v1052 = vadd.f32 %v907, %v1051
        %v1053 = vpop.f32.mrf.mxu0
        %1054 = vmatprep.mubr.f32.mxu0 0.0
        %1055 = vmatmul.mubr.f32.gmra.mxu0 %v740
        %v1056 = vpop.f32.mrf.mxu0
        %v1057 = vadd.f32 %v912, %v1056
        %v1058 = vpop.f32.mrf.mxu0
        %1059 = vmatprep.mubr.f32.mxu0 0.0
        %1060 = vmatmul.mubr.f32.gmra.mxu0 %v743
        %v1061 = vpop.f32.mrf.mxu0
        %v1062 = vadd.f32 %v917, %v1061
        %v1063 = vpop.f32.mrf.mxu0
        %1064 = vmatprep.mubr.f32.mxu0 0.0
        %1065 = vmatmul.mubr.f32.gmra.mxu0 %v746
        %v1066 = vpop.f32.mrf.mxu0
        %v1067 = vadd.f32 %v922, %v1066
        %v1068 = vpop.f32.mrf.mxu0
        %1069 = vmatprep.mubr.f32.mxu0 0.0
        %1070 = vmatmul.mubr.f32.gmra.mxu0 %v749
        %v1071 = vpop.f32.mrf.mxu0
        %v1072 = vadd.f32 %v927, %v1071
        %v1073 = vpop.f32.mrf.mxu0
        %1074 = vmatprep.mubr.f32.mxu0 0.0
        %1075 = vmatmul.mubr.f32.gmra.mxu0 %v752
        %v1076 = vpop.f32.mrf.mxu0
        %v1077 = vadd.f32 %v932, %v1076
        %v1078 = vpop.f32.mrf.mxu0
        %1079 = vmatprep.mubr.f32.mxu0 0.0
        %1080 = vmatmul.mubr.f32.gmra.mxu0 %v755
        %v1081 = vpop.f32.mrf.mxu0
        %v1082 = vadd.f32 %v937, %v1081
        %v1083 = vpop.f32.mrf.mxu0
        %1084 = vmatprep.mubr.f32.mxu0 0.0
        %1085 = vmatmul.mubr.f32.gmra.mxu0 %v758
        %v1086 = vpop.f32.mrf.mxu0
        %v1087 = vadd.f32 %v942, %v1086
        %v1088 = vpop.f32.mrf.mxu0
        %1089 = vmatprep.mubr.f32.mxu0 0.0
        %1090 = vmatmul.mubr.f32.gmra.mxu0 %v761
        %v1091 = vpop.f32.mrf.mxu0
        %v1092 = vadd.f32 %v947, %v1091
        %v1093 = vpop.f32.mrf.mxu0
        %1094 = vmatprep.mubr.f32.mxu0 0.0
        %1095 = vmatmul.mubr.f32.gmra.mxu0 %v764
        %v1096 = vpop.f32.mrf.mxu0
        %v1097 = vadd.f32 %v952, %v1096
        %v1098 = vpop.f32.mrf.mxu0
        %1099 = vmatprep.mubr.f32.mxu0 0.0
        %1100 = vmatmul.mubr.f32.gmra.mxu0 %v767
        %v1101 = vpop.f32.mrf.mxu0
        %v1102 = vadd.f32 %v957, %v1101
        %v1103 = vpop.f32.mrf.mxu0
        %1104 = vmatprep.mubr.f32.mxu0 0.0
        %1105 = vmatmul.mubr.f32.gmra.mxu0 %v770
        %v1106 = vpop.f32.mrf.mxu0
        %v1107 = vadd.f32 %v962, %v1106
        %v1108 = vpop.f32.mrf.mxu0
        %1109 = vdwg.mxu0
        %1110 = vmatprep.subr.mxu0 0.0
        %1111 = vmatpush1.msra.mxu0 %v689
        %1112 = vmatprep.subr.mxu0 0.0
        %1113 = vmatpush1.msra.mxu0 %v688
        %1114 = vmatprep.subr.mxu0 0.0
        %1115 = vmatpush1.msra.mxu0 %v687
        %1116 = vmatprep.subr.mxu0 0.0
        %1117 = vmatpush1.msra.mxu0 %v686
        %1118 = vmatprep.subr.mxu0 0.0
        %1119 = vmatpush1.msra.mxu0 %v685
        %1120 = vmatprep.subr.mxu0 0.0
        %1121 = vmatpush1.msra.mxu0 %v684
        %1122 = vmatprep.subr.mxu0 0.0
        %1123 = vmatpush1.msra.mxu0 %v683
        %1124 = vmatprep.subr.mxu0 0.0
        %1125 = vmatpush1.msra.mxu0 %v682
        %1126 = vmatprep.subr.mxu0 0.0
        %1127 = vmatpush1.msra.mxu0 %v681
        %1128 = vmatprep.subr.mxu0 0.0
        %1129 = vmatpush1.msra.mxu0 %v680
        %1130 = vmatprep.subr.mxu0 0.0
        %1131 = vmatpush1.msra.mxu0 %v679
        %1132 = vmatprep.subr.mxu0 0.0
        %1133 = vmatpush1.msra.mxu0 %v678
        %1134 = vmatprep.subr.mxu0 0.0
        %1135 = vmatpush1.msra.mxu0 %v677
        %1136 = vmatprep.subr.mxu0 0.0
        %1137 = vmatpush1.msra.mxu0 %v676
        %1138 = vmatprep.subr.mxu0 0.0
        %1139 = vmatpush1.msra.mxu0 %v675
        %1140 = vmatprep.subr.mxu0 0.0
        %1141 = vmatpush1.msra.mxu0 %v674
        %1142 = vmatprep.subr.mxu0 0.0
        %1143 = vmatpush2.msra.mxu0 %v705
        %1144 = vmatprep.subr.mxu0 0.0
        %1145 = vmatpush2.msra.mxu0 %v704
        %1146 = vmatprep.subr.mxu0 0.0
        %1147 = vmatpush2.msra.mxu0 %v703
        %1148 = vmatprep.subr.mxu0 0.0
        %1149 = vmatpush2.msra.mxu0 %v702
        %1150 = vmatprep.subr.mxu0 0.0
        %1151 = vmatpush2.msra.mxu0 %v701
        %1152 = vmatprep.subr.mxu0 0.0
        %1153 = vmatpush2.msra.mxu0 %v700
        %1154 = vmatprep.subr.mxu0 0.0
        %1155 = vmatpush2.msra.mxu0 %v699
        %1156 = vmatprep.subr.mxu0 0.0
        %1157 = vmatpush2.msra.mxu0 %v698
        %1158 = vmatprep.subr.mxu0 0.0
        %1159 = vmatpush2.msra.mxu0 %v697
        %1160 = vmatprep.subr.mxu0 0.0
        %1161 = vmatpush2.msra.mxu0 %v696
        %1162 = vmatprep.subr.mxu0 0.0
        %1163 = vmatpush2.msra.mxu0 %v695
        %1164 = vmatprep.subr.mxu0 0.0
        %1165 = vmatpush2.msra.mxu0 %v694
        %1166 = vmatprep.subr.mxu0 0.0
        %1167 = vmatpush2.msra.mxu0 %v693
        %1168 = vmatprep.subr.mxu0 0.0
        %1169 = vmatpush2.msra.mxu0 %v692
        %1170 = vmatprep.subr.mxu0 0.0
        %1171 = vmatpush2.msra.mxu0 %v691
        %1172 = vmatprep.subr.mxu0 0.0
        %1173 = vmatpush2.msra.mxu0 %v690
        %1174 = vmatprep.mubr.f32.mxu0 %v627
        %1175 = vmatmul.mubr.f32.gmra.mxu0 %v626
        %v1176 = vpop.f32.mrf.mxu0
        %v1177 = vadd.f32 %v1032, %v1176
        %v1178 = vpop.f32.mrf.mxu0
        %1179 = vmatprep.mubr.f32.mxu0 %v630
        %1180 = vmatmul.mubr.f32.gmra.mxu0 %v629
        %v1181 = vpop.f32.mrf.mxu0
        %v1182 = vadd.f32 %v1037, %v1181
        %v1183 = vpop.f32.mrf.mxu0
        %1184 = vmatprep.mubr.f32.mxu0 %v633
        %1185 = vmatmul.mubr.f32.gmra.mxu0 %v632
        %v1186 = vpop.f32.mrf.mxu0
        %v1187 = vadd.f32 %v1042, %v1186
        %v1188 = vpop.f32.mrf.mxu0
        %1189 = vmatprep.mubr.f32.mxu0 %v636
        %1190 = vmatmul.mubr.f32.gmra.mxu0 %v635
        %v1191 = vpop.f32.mrf.mxu0
        %v1192 = vadd.f32 %v1047, %v1191
        %v1193 = vpop.f32.mrf.mxu0
        %1194 = vmatprep.mubr.f32.mxu0 %v639
        %1195 = vmatmul.mubr.f32.gmra.mxu0 %v638
        %v1196 = vpop.f32.mrf.mxu0
        %v1197 = vadd.f32 %v1052, %v1196
        %v1198 = vpop.f32.mrf.mxu0
        %1199 = vmatprep.mubr.f32.mxu0 %v642
        %1200 = vmatmul.mubr.f32.gmra.mxu0 %v641
        %v1201 = vpop.f32.mrf.mxu0
        %v1202 = vadd.f32 %v1057, %v1201
        %v1203 = vpop.f32.mrf.mxu0
        %1204 = vmatprep.mubr.f32.mxu0 %v645
        %1205 = vmatmul.mubr.f32.gmra.mxu0 %v644
        %v1206 = vpop.f32.mrf.mxu0
        %v1207 = vadd.f32 %v1062, %v1206
        %v1208 = vpop.f32.mrf.mxu0
        %1209 = vmatprep.mubr.f32.mxu0 %v648
        %1210 = vmatmul.mubr.f32.gmra.mxu0 %v647
        %v1211 = vpop.f32.mrf.mxu0
        %v1212 = vadd.f32 %v1067, %v1211
        %v1213 = vpop.f32.mrf.mxu0
        %1214 = vmatprep.mubr.f32.mxu0 %v651
        %1215 = vmatmul.mubr.f32.gmra.mxu0 %v650
        %v1216 = vpop.f32.mrf.mxu0
        %v1217 = vadd.f32 %v1072, %v1216
        %v1218 = vpop.f32.mrf.mxu0
        %1219 = vmatprep.mubr.f32.mxu0 %v654
        %1220 = vmatmul.mubr.f32.gmra.mxu0 %v653
        %v1221 = vpop.f32.mrf.mxu0
        %v1222 = vadd.f32 %v1077, %v1221
        %v1223 = vpop.f32.mrf.mxu0
        %1224 = vmatprep.mubr.f32.mxu0 %v657
        %1225 = vmatmul.mubr.f32.gmra.mxu0 %v656
        %v1226 = vpop.f32.mrf.mxu0
        %v1227 = vadd.f32 %v1082, %v1226
        %v1228 = vpop.f32.mrf.mxu0
        %1229 = vmatprep.mubr.f32.mxu0 %v660
        %1230 = vmatmul.mubr.f32.gmra.mxu0 %v659
        %v1231 = vpop.f32.mrf.mxu0
        %v1232 = vadd.f32 %v1087, %v1231
        %v1233 = vpop.f32.mrf.mxu0
        %1234 = vmatprep.mubr.f32.mxu0 %v663
        %1235 = vmatmul.mubr.f32.gmra.mxu0 %v662
        %v1236 = vpop.f32.mrf.mxu0
        %v1237 = vadd.f32 %v1092, %v1236
        %v1238 = vpop.f32.mrf.mxu0
        %1239 = vmatprep.mubr.f32.mxu0 %v666
        %1240 = vmatmul.mubr.f32.gmra.mxu0 %v665
        %v1241 = vpop.f32.mrf.mxu0
        %v1242 = vadd.f32 %v1097, %v1241
        %v1243 = vpop.f32.mrf.mxu0
        %1244 = vmatprep.mubr.f32.mxu0 %v669
        %1245 = vmatmul.mubr.f32.gmra.mxu0 %v668
        %v1246 = vpop.f32.mrf.mxu0
        %v1247 = vadd.f32 %v1102, %v1246
        %v1248 = vpop.f32.mrf.mxu0
        %1249 = vmatprep.mubr.f32.mxu0 %v672
        %1250 = vmatmul.mubr.f32.gmra.mxu0 %v671
        %v1251 = vpop.f32.mrf.mxu0
        %v1252 = vadd.f32 %v1107, %v1251
        %v1253 = vpop.f32.mrf.mxu0
        %1254 = vdwg.mxu0
        %1255 = vmatprep.subr.mxu0 0.0
        %1256 = vmatpush1.msra.mxu0 %v721
        %1257 = vmatprep.subr.mxu0 0.0
        %1258 = vmatpush1.msra.mxu0 %v720
        %1259 = vmatprep.subr.mxu0 0.0
        %1260 = vmatpush1.msra.mxu0 %v719
        %1261 = vmatprep.subr.mxu0 0.0
        %1262 = vmatpush1.msra.mxu0 %v718
        %1263 = vmatprep.subr.mxu0 0.0
        %1264 = vmatpush1.msra.mxu0 %v717
        %1265 = vmatprep.subr.mxu0 0.0
        %1266 = vmatpush1.msra.mxu0 %v716
        %1267 = vmatprep.subr.mxu0 0.0
        %1268 = vmatpush1.msra.mxu0 %v715
        %1269 = vmatprep.subr.mxu0 0.0
        %1270 = vmatpush1.msra.mxu0 %v714
        %1271 = vmatprep.subr.mxu0 0.0
        %1272 = vmatpush1.msra.mxu0 %v713
        %1273 = vmatprep.subr.mxu0 0.0
        %1274 = vmatpush1.msra.mxu0 %v712
        %1275 = vmatprep.subr.mxu0 0.0
        %1276 = vmatpush1.msra.mxu0 %v711
        %1277 = vmatprep.subr.mxu0 0.0
        %1278 = vmatpush1.msra.mxu0 %v710
        %1279 = vmatprep.subr.mxu0 0.0
        %1280 = vmatpush1.msra.mxu0 %v709
        %1281 = vmatprep.subr.mxu0 0.0
        %1282 = vmatpush1.msra.mxu0 %v708
        %1283 = vmatprep.subr.mxu0 0.0
        %1284 = vmatpush1.msra.mxu0 %v707
        %1285 = vmatprep.subr.mxu0 0.0
        %1286 = vmatpush1.msra.mxu0 %v706
        %1287 = vmatprep.subr.mxu0 0.0
        %1288 = vmatpush2.msra.mxu0 0.0
        %1289 = vmatprep.subr.mxu0 0.0
        %1290 = vmatpush2.msra.mxu0 0.0
        %1291 = vmatprep.subr.mxu0 0.0
        %1292 = vmatpush2.msra.mxu0 0.0
        %1293 = vmatprep.subr.mxu0 0.0
        %1294 = vmatpush2.msra.mxu0 0.0
        %1295 = vmatprep.subr.mxu0 0.0
        %1296 = vmatpush2.msra.mxu0 0.0
        %1297 = vmatprep.subr.mxu0 0.0
        %1298 = vmatpush2.msra.mxu0 0.0
        %1299 = vmatprep.subr.mxu0 0.0
        %1300 = vmatpush2.msra.mxu0 0.0
        %1301 = vmatprep.subr.mxu0 0.0
        %1302 = vmatpush2.msra.mxu0 0.0
        %1303 = vmatprep.subr.mxu0 0.0
        %1304 = vmatpush2.msra.mxu0 0.0
        %1305 = vmatprep.subr.mxu0 0.0
        %1306 = vmatpush2.msra.mxu0 0.0
        %1307 = vmatprep.subr.mxu0 0.0
        %1308 = vmatpush2.msra.mxu0 0.0
        %1309 = vmatprep.subr.mxu0 0.0
        %1310 = vmatpush2.msra.mxu0 0.0
        %1311 = vmatprep.subr.mxu0 0.0
        %1312 = vmatpush2.msra.mxu0 0.0
        %1313 = vmatprep.subr.mxu0 0.0
        %1314 = vmatpush2.msra.mxu0 0.0
        %1315 = vmatprep.subr.mxu0 0.0
        %1316 = vmatpush2.msra.mxu0 0.0
        %1317 = vmatprep.subr.mxu0 0.0
        %1318 = vmatpush2.msra.mxu0 0.0
        %1319 = vmatprep.mubr.f32.mxu0 0.0
        %1320 = vmatmul.mubr.f32.gmra.mxu0 %v628
        %v1321 = vpop.f32.mrf.mxu0
        %v1322 = vadd.f32 %v1177, %v1321
        %v1323 = vpop.f32.mrf.mxu0
        %1324 = vmatprep.mubr.f32.mxu0 0.0
        %1325 = vmatmul.mubr.f32.gmra.mxu0 %v631
        %v1326 = vpop.f32.mrf.mxu0
        %v1327 = vadd.f32 %v1182, %v1326
        %v1328 = vpop.f32.mrf.mxu0
        %1329 = vmatprep.mubr.f32.mxu0 0.0
        %1330 = vmatmul.mubr.f32.gmra.mxu0 %v634
        %v1331 = vpop.f32.mrf.mxu0
        %v1332 = vadd.f32 %v1187, %v1331
        %v1333 = vpop.f32.mrf.mxu0
        %1334 = vmatprep.mubr.f32.mxu0 0.0
        %1335 = vmatmul.mubr.f32.gmra.mxu0 %v637
        %v1336 = vpop.f32.mrf.mxu0
        %v1337 = vadd.f32 %v1192, %v1336
        %v1338 = vpop.f32.mrf.mxu0
        %1339 = vmatprep.mubr.f32.mxu0 0.0
        %1340 = vmatmul.mubr.f32.gmra.mxu0 %v640
        %v1341 = vpop.f32.mrf.mxu0
        %v1342 = vadd.f32 %v1197, %v1341
        %v1343 = vpop.f32.mrf.mxu0
        %1344 = vmatprep.mubr.f32.mxu0 0.0
        %1345 = vmatmul.mubr.f32.gmra.mxu0 %v643
        %v1346 = vpop.f32.mrf.mxu0
        %v1347 = vadd.f32 %v1202, %v1346
        %v1348 = vpop.f32.mrf.mxu0
        %1349 = vmatprep.mubr.f32.mxu0 0.0
        %1350 = vmatmul.mubr.f32.gmra.mxu0 %v646
        %v1351 = vpop.f32.mrf.mxu0
        %v1352 = vadd.f32 %v1207, %v1351
        %v1353 = vpop.f32.mrf.mxu0
        %1354 = vmatprep.mubr.f32.mxu0 0.0
        %1355 = vmatmul.mubr.f32.gmra.mxu0 %v649
        %v1356 = vpop.f32.mrf.mxu0
        %v1357 = vadd.f32 %v1212, %v1356
        %v1358 = vpop.f32.mrf.mxu0
        %1359 = vmatprep.mubr.f32.mxu0 0.0
        %1360 = vmatmul.mubr.f32.gmra.mxu0 %v652
        %v1361 = vpop.f32.mrf.mxu0
        %v1362 = vadd.f32 %v1217, %v1361
        %v1363 = vpop.f32.mrf.mxu0
        %1364 = vmatprep.mubr.f32.mxu0 0.0
        %1365 = vmatmul.mubr.f32.gmra.mxu0 %v655
        %v1366 = vpop.f32.mrf.mxu0
        %v1367 = vadd.f32 %v1222, %v1366
        %v1368 = vpop.f32.mrf.mxu0
        %1369 = vmatprep.mubr.f32.mxu0 0.0
        %1370 = vmatmul.mubr.f32.gmra.mxu0 %v658
        %v1371 = vpop.f32.mrf.mxu0
        %v1372 = vadd.f32 %v1227, %v1371
        %v1373 = vpop.f32.mrf.mxu0
        %1374 = vmatprep.mubr.f32.mxu0 0.0
        %1375 = vmatmul.mubr.f32.gmra.mxu0 %v661
        %v1376 = vpop.f32.mrf.mxu0
        %v1377 = vadd.f32 %v1232, %v1376
        %v1378 = vpop.f32.mrf.mxu0
        %1379 = vmatprep.mubr.f32.mxu0 0.0
        %1380 = vmatmul.mubr.f32.gmra.mxu0 %v664
        %v1381 = vpop.f32.mrf.mxu0
        %v1382 = vadd.f32 %v1237, %v1381
        %v1383 = vpop.f32.mrf.mxu0
        %1384 = vmatprep.mubr.f32.mxu0 0.0
        %1385 = vmatmul.mubr.f32.gmra.mxu0 %v667
        %v1386 = vpop.f32.mrf.mxu0
        %v1387 = vadd.f32 %v1242, %v1386
        %v1388 = vpop.f32.mrf.mxu0
        %1389 = vmatprep.mubr.f32.mxu0 0.0
        %1390 = vmatmul.mubr.f32.gmra.mxu0 %v670
        %v1391 = vpop.f32.mrf.mxu0
        %v1392 = vadd.f32 %v1247, %v1391
        %v1393 = vpop.f32.mrf.mxu0
        %1394 = vmatprep.mubr.f32.mxu0 0.0
        %1395 = vmatmul.mubr.f32.gmra.mxu0 %v673
        %v1396 = vpop.f32.mrf.mxu0
        %v1397 = vadd.f32 %v1252, %v1396
        %v1398 = vpop.f32.mrf.mxu0
        %1399 = vdwg.mxu0
        %s1400 = scalar_lea.vmem [#allocation3], 96
        %v1401 = vld [vmem:[%s1400] sm:$0xff]
        %v1402 = vld [vmem:[%s1400 + $0x8] sm:$0xff]
        %v1403 = vld [vmem:[%s1400 + $0x10] sm:$0xff]
        %v1404 = vld [vmem:[%s1400 + $0x18] sm:$0xff]
        %v1405 = vld [vmem:[%s1400 + $0x20] sm:$0xff]
        %v1406 = vld [vmem:[%s1400 + $0x28] sm:$0xff]
        %v1407 = vld [vmem:[%s1400 + $0x30] sm:$0xff]
        %v1408 = vld [vmem:[%s1400 + $0x38] sm:$0xff]
        %v1409 = vld [vmem:[%s1400 + $0x40] sm:$0xff]
        %v1410 = vld [vmem:[%s1400 + $0x48] sm:$0xff]
        %v1411 = vld [vmem:[%s1400 + $0x50] sm:$0xff]
        %v1412 = vld [vmem:[%s1400 + $0x58] sm:$0xff]
        %v1413 = vld [vmem:[%s1400 + $0x60] sm:$0xff]
        %v1414 = vld [vmem:[%s1400 + $0x68] sm:$0xff]
        %v1415 = vld [vmem:[%s1400 + $0x70] sm:$0xff]
        %v1416 = vld [vmem:[%s1400 + $0x78] sm:$0xff]
        %v1417 = vld [vmem:[%s1400 + $0x80] sm:$0xff]
        %v1418 = vld [vmem:[%s1400 + $0x88] sm:$0xff]
        %v1419 = vld [vmem:[%s1400 + $0x90] sm:$0xff]
        %v1420 = vld [vmem:[%s1400 + $0x98] sm:$0xff]
        %v1421 = vld [vmem:[%s1400 + $0xa0] sm:$0xff]
        %v1422 = vld [vmem:[%s1400 + $0xa8] sm:$0xff]
        %v1423 = vld [vmem:[%s1400 + $0xb0] sm:$0xff]
        %v1424 = vld [vmem:[%s1400 + $0xb8] sm:$0xff]
        %v1425 = vld [vmem:[%s1400 + $0xc0] sm:$0xff]
        %v1426 = vld [vmem:[%s1400 + $0xc8] sm:$0xff]
        %v1427 = vld [vmem:[%s1400 + $0xd0] sm:$0xff]
        %v1428 = vld [vmem:[%s1400 + $0xd8] sm:$0xff]
        %v1429 = vld [vmem:[%s1400 + $0xe0] sm:$0xff]
        %v1430 = vld [vmem:[%s1400 + $0xe8] sm:$0xff]
        %v1431 = vld [vmem:[%s1400 + $0xf0] sm:$0xff]
        %v1432 = vld [vmem:[%s1400 + $0xf8] sm:$0xff]
        %v1433 = vld [vmem:[%s1400 + $0x100] sm:$0xff]
        %v1434 = vld [vmem:[%s1400 + $0x108] sm:$0xff]
        %v1435 = vld [vmem:[%s1400 + $0x110] sm:$0xff]
        %v1436 = vld [vmem:[%s1400 + $0x118] sm:$0xff]
        %v1437 = vld [vmem:[%s1400 + $0x120] sm:$0xff]
        %v1438 = vld [vmem:[%s1400 + $0x128] sm:$0xff]
        %v1439 = vld [vmem:[%s1400 + $0x130] sm:$0xff]
        %v1440 = vld [vmem:[%s1400 + $0x138] sm:$0xff]
        %v1441 = vld [vmem:[%s1400 + $0x140] sm:$0xff]
        %v1442 = vld [vmem:[%s1400 + $0x148] sm:$0xff]
        %v1443 = vld [vmem:[%s1400 + $0x150] sm:$0xff]
        %v1444 = vld [vmem:[%s1400 + $0x158] sm:$0xff]
        %v1445 = vld [vmem:[%s1400 + $0x160] sm:$0xff]
        %v1446 = vld [vmem:[%s1400 + $0x168] sm:$0xff]
        %v1447 = vld [vmem:[%s1400 + $0x170] sm:$0xff]
        %v1448 = vld [vmem:[%s1400 + $0x178] sm:$0xff]
        %s1449 = scalar_lea.vmem %s3, 768
        %v1450 = vld [vmem:[%s1449] sm:$0xff]
        %v1451 = vld [vmem:[%s1449 + $0x8] sm:$0xff]
        %v1452 = vld [vmem:[%s1449 + $0x10] sm:$0xff]
        %v1453 = vld [vmem:[%s1449 + $0x18] sm:$0xff]
        %v1454 = vld [vmem:[%s1449 + $0x20] sm:$0xff]
        %v1455 = vld [vmem:[%s1449 + $0x28] sm:$0xff]
        %v1456 = vld [vmem:[%s1449 + $0x30] sm:$0xff]
        %v1457 = vld [vmem:[%s1449 + $0x38] sm:$0xff]
        %v1458 = vld [vmem:[%s1449 + $0x40] sm:$0xff]
        %v1459 = vld [vmem:[%s1449 + $0x48] sm:$0xff]
        %v1460 = vld [vmem:[%s1449 + $0x50] sm:$0xff]
        %v1461 = vld [vmem:[%s1449 + $0x58] sm:$0xff]
        %v1462 = vld [vmem:[%s1449 + $0x60] sm:$0xff]
        %v1463 = vld [vmem:[%s1449 + $0x68] sm:$0xff]
        %v1464 = vld [vmem:[%s1449 + $0x70] sm:$0xff]
        %v1465 = vld [vmem:[%s1449 + $0x78] sm:$0xff]
        %v1466 = vld [vmem:[%s1449 + $0x80] sm:$0xff]
        %v1467 = vld [vmem:[%s1449 + $0x88] sm:$0xff]
        %v1468 = vld [vmem:[%s1449 + $0x90] sm:$0xff]
        %v1469 = vld [vmem:[%s1449 + $0x98] sm:$0xff]
        %v1470 = vld [vmem:[%s1449 + $0xa0] sm:$0xff]
        %v1471 = vld [vmem:[%s1449 + $0xa8] sm:$0xff]
        %v1472 = vld [vmem:[%s1449 + $0xb0] sm:$0xff]
        %v1473 = vld [vmem:[%s1449 + $0xb8] sm:$0xff]
        %v1474 = vld [vmem:[%s1449 + $0xc0] sm:$0xff]
        %v1475 = vld [vmem:[%s1449 + $0xc8] sm:$0xff]
        %v1476 = vld [vmem:[%s1449 + $0xd0] sm:$0xff]
        %v1477 = vld [vmem:[%s1449 + $0xd8] sm:$0xff]
        %v1478 = vld [vmem:[%s1449 + $0xe0] sm:$0xff]
        %v1479 = vld [vmem:[%s1449 + $0xe8] sm:$0xff]
        %v1480 = vld [vmem:[%s1449 + $0xf0] sm:$0xff]
        %v1481 = vld [vmem:[%s1449 + $0xf8] sm:$0xff]
        %v1482 = vld [vmem:[%s1449 + $0x100] sm:$0xff]
        %v1483 = vld [vmem:[%s1449 + $0x108] sm:$0xff]
        %v1484 = vld [vmem:[%s1449 + $0x110] sm:$0xff]
        %v1485 = vld [vmem:[%s1449 + $0x118] sm:$0xff]
        %v1486 = vld [vmem:[%s1449 + $0x120] sm:$0xff]
        %v1487 = vld [vmem:[%s1449 + $0x128] sm:$0xff]
        %v1488 = vld [vmem:[%s1449 + $0x130] sm:$0xff]
        %v1489 = vld [vmem:[%s1449 + $0x138] sm:$0xff]
        %v1490 = vld [vmem:[%s1449 + $0x140] sm:$0xff]
        %v1491 = vld [vmem:[%s1449 + $0x148] sm:$0xff]
        %v1492 = vld [vmem:[%s1449 + $0x150] sm:$0xff]
        %v1493 = vld [vmem:[%s1449 + $0x158] sm:$0xff]
        %v1494 = vld [vmem:[%s1449 + $0x160] sm:$0xff]
        %v1495 = vld [vmem:[%s1449 + $0x168] sm:$0xff]
        %v1496 = vld [vmem:[%s1449 + $0x170] sm:$0xff]
        %v1497 = vld [vmem:[%s1449 + $0x178] sm:$0xff]
        %1498 = vmatprep.subr.mxu0 0.0
        %1499 = vmatpush1.msra.mxu0 %v1465
        %1500 = vmatprep.subr.mxu0 0.0
        %1501 = vmatpush1.msra.mxu0 %v1464
        %1502 = vmatprep.subr.mxu0 0.0
        %1503 = vmatpush1.msra.mxu0 %v1463
        %1504 = vmatprep.subr.mxu0 0.0
        %1505 = vmatpush1.msra.mxu0 %v1462
        %1506 = vmatprep.subr.mxu0 0.0
        %1507 = vmatpush1.msra.mxu0 %v1461
        %1508 = vmatprep.subr.mxu0 0.0
        %1509 = vmatpush1.msra.mxu0 %v1460
        %1510 = vmatprep.subr.mxu0 0.0
        %1511 = vmatpush1.msra.mxu0 %v1459
        %1512 = vmatprep.subr.mxu0 0.0
        %1513 = vmatpush1.msra.mxu0 %v1458
        %1514 = vmatprep.subr.mxu0 0.0
        %1515 = vmatpush1.msra.mxu0 %v1457
        %1516 = vmatprep.subr.mxu0 0.0
        %1517 = vmatpush1.msra.mxu0 %v1456
        %1518 = vmatprep.subr.mxu0 0.0
        %1519 = vmatpush1.msra.mxu0 %v1455
        %1520 = vmatprep.subr.mxu0 0.0
        %1521 = vmatpush1.msra.mxu0 %v1454
        %1522 = vmatprep.subr.mxu0 0.0
        %1523 = vmatpush1.msra.mxu0 %v1453
        %1524 = vmatprep.subr.mxu0 0.0
        %1525 = vmatpush1.msra.mxu0 %v1452
        %1526 = vmatprep.subr.mxu0 0.0
        %1527 = vmatpush1.msra.mxu0 %v1451
        %1528 = vmatprep.subr.mxu0 0.0
        %1529 = vmatpush1.msra.mxu0 %v1450
        %1530 = vmatprep.subr.mxu0 0.0
        %1531 = vmatpush2.msra.mxu0 %v1481
        %1532 = vmatprep.subr.mxu0 0.0
        %1533 = vmatpush2.msra.mxu0 %v1480
        %1534 = vmatprep.subr.mxu0 0.0
        %1535 = vmatpush2.msra.mxu0 %v1479
        %1536 = vmatprep.subr.mxu0 0.0
        %1537 = vmatpush2.msra.mxu0 %v1478
        %1538 = vmatprep.subr.mxu0 0.0
        %1539 = vmatpush2.msra.mxu0 %v1477
        %1540 = vmatprep.subr.mxu0 0.0
        %1541 = vmatpush2.msra.mxu0 %v1476
        %1542 = vmatprep.subr.mxu0 0.0
        %1543 = vmatpush2.msra.mxu0 %v1475
        %1544 = vmatprep.subr.mxu0 0.0
        %1545 = vmatpush2.msra.mxu0 %v1474
        %1546 = vmatprep.subr.mxu0 0.0
        %1547 = vmatpush2.msra.mxu0 %v1473
        %1548 = vmatprep.subr.mxu0 0.0
        %1549 = vmatpush2.msra.mxu0 %v1472
        %1550 = vmatprep.subr.mxu0 0.0
        %1551 = vmatpush2.msra.mxu0 %v1471
        %1552 = vmatprep.subr.mxu0 0.0
        %1553 = vmatpush2.msra.mxu0 %v1470
        %1554 = vmatprep.subr.mxu0 0.0
        %1555 = vmatpush2.msra.mxu0 %v1469
        %1556 = vmatprep.subr.mxu0 0.0
        %1557 = vmatpush2.msra.mxu0 %v1468
        %1558 = vmatprep.subr.mxu0 0.0
        %1559 = vmatpush2.msra.mxu0 %v1467
        %1560 = vmatprep.subr.mxu0 0.0
        %1561 = vmatpush2.msra.mxu0 %v1466
        %1562 = vmatprep.mubr.f32.mxu0 %v1402
        %1563 = vmatmul.mubr.f32.gmra.mxu0 %v1401
        %v1564 = vpop.f32.mrf.mxu0
        %v1565 = vadd.f32 0.0, %v1564
        %v1566 = vpop.f32.mrf.mxu0
        %1567 = vmatprep.mubr.f32.mxu0 %v1405
        %1568 = vmatmul.mubr.f32.gmra.mxu0 %v1404
        %v1569 = vpop.f32.mrf.mxu0
        %v1570 = vadd.f32 0.0, %v1569
        %v1571 = vpop.f32.mrf.mxu0
        %1572 = vmatprep.mubr.f32.mxu0 %v1408
        %1573 = vmatmul.mubr.f32.gmra.mxu0 %v1407
        %v1574 = vpop.f32.mrf.mxu0
        %v1575 = vadd.f32 0.0, %v1574
        %v1576 = vpop.f32.mrf.mxu0
        %1577 = vmatprep.mubr.f32.mxu0 %v1411
        %1578 = vmatmul.mubr.f32.gmra.mxu0 %v1410
        %v1579 = vpop.f32.mrf.mxu0
        %v1580 = vadd.f32 0.0, %v1579
        %v1581 = vpop.f32.mrf.mxu0
        %1582 = vmatprep.mubr.f32.mxu0 %v1414
        %1583 = vmatmul.mubr.f32.gmra.mxu0 %v1413
        %v1584 = vpop.f32.mrf.mxu0
        %v1585 = vadd.f32 0.0, %v1584
        %v1586 = vpop.f32.mrf.mxu0
        %1587 = vmatprep.mubr.f32.mxu0 %v1417
        %1588 = vmatmul.mubr.f32.gmra.mxu0 %v1416
        %v1589 = vpop.f32.mrf.mxu0
        %v1590 = vadd.f32 0.0, %v1589
        %v1591 = vpop.f32.mrf.mxu0
        %1592 = vmatprep.mubr.f32.mxu0 %v1420
        %1593 = vmatmul.mubr.f32.gmra.mxu0 %v1419
        %v1594 = vpop.f32.mrf.mxu0
        %v1595 = vadd.f32 0.0, %v1594
        %v1596 = vpop.f32.mrf.mxu0
        %1597 = vmatprep.mubr.f32.mxu0 %v1423
        %1598 = vmatmul.mubr.f32.gmra.mxu0 %v1422
        %v1599 = vpop.f32.mrf.mxu0
        %v1600 = vadd.f32 0.0, %v1599
        %v1601 = vpop.f32.mrf.mxu0
        %1602 = vmatprep.mubr.f32.mxu0 %v1426
        %1603 = vmatmul.mubr.f32.gmra.mxu0 %v1425
        %v1604 = vpop.f32.mrf.mxu0
        %v1605 = vadd.f32 0.0, %v1604
        %v1606 = vpop.f32.mrf.mxu0
        %1607 = vmatprep.mubr.f32.mxu0 %v1429
        %1608 = vmatmul.mubr.f32.gmra.mxu0 %v1428
        %v1609 = vpop.f32.mrf.mxu0
        %v1610 = vadd.f32 0.0, %v1609
        %v1611 = vpop.f32.mrf.mxu0
        %1612 = vmatprep.mubr.f32.mxu0 %v1432
        %1613 = vmatmul.mubr.f32.gmra.mxu0 %v1431
        %v1614 = vpop.f32.mrf.mxu0
        %v1615 = vadd.f32 0.0, %v1614
        %v1616 = vpop.f32.mrf.mxu0
        %1617 = vmatprep.mubr.f32.mxu0 %v1435
        %1618 = vmatmul.mubr.f32.gmra.mxu0 %v1434
        %v1619 = vpop.f32.mrf.mxu0
        %v1620 = vadd.f32 0.0, %v1619
        %v1621 = vpop.f32.mrf.mxu0
        %1622 = vmatprep.mubr.f32.mxu0 %v1438
        %1623 = vmatmul.mubr.f32.gmra.mxu0 %v1437
        %v1624 = vpop.f32.mrf.mxu0
        %v1625 = vadd.f32 0.0, %v1624
        %v1626 = vpop.f32.mrf.mxu0
        %1627 = vmatprep.mubr.f32.mxu0 %v1441
        %1628 = vmatmul.mubr.f32.gmra.mxu0 %v1440
        %v1629 = vpop.f32.mrf.mxu0
        %v1630 = vadd.f32 0.0, %v1629
        %v1631 = vpop.f32.mrf.mxu0
        %1632 = vmatprep.mubr.f32.mxu0 %v1444
        %1633 = vmatmul.mubr.f32.gmra.mxu0 %v1443
        %v1634 = vpop.f32.mrf.mxu0
        %v1635 = vadd.f32 0.0, %v1634
        %v1636 = vpop.f32.mrf.mxu0
        %1637 = vmatprep.mubr.f32.mxu0 %v1447
        %1638 = vmatmul.mubr.f32.gmra.mxu0 %v1446
        %v1639 = vpop.f32.mrf.mxu0
        %v1640 = vadd.f32 0.0, %v1639
        %v1641 = vpop.f32.mrf.mxu0
        %1642 = vdwg.mxu0
        %1643 = vmatprep.subr.mxu0 0.0
        %1644 = vmatpush1.msra.mxu0 %v1497
        %1645 = vmatprep.subr.mxu0 0.0
        %1646 = vmatpush1.msra.mxu0 %v1496
        %1647 = vmatprep.subr.mxu0 0.0
        %1648 = vmatpush1.msra.mxu0 %v1495
        %1649 = vmatprep.subr.mxu0 0.0
        %1650 = vmatpush1.msra.mxu0 %v1494
        %1651 = vmatprep.subr.mxu0 0.0
        %1652 = vmatpush1.msra.mxu0 %v1493
        %1653 = vmatprep.subr.mxu0 0.0
        %1654 = vmatpush1.msra.mxu0 %v1492
        %1655 = vmatprep.subr.mxu0 0.0
        %1656 = vmatpush1.msra.mxu0 %v1491
        %1657 = vmatprep.subr.mxu0 0.0
        %1658 = vmatpush1.msra.mxu0 %v1490
        %1659 = vmatprep.subr.mxu0 0.0
        %1660 = vmatpush1.msra.mxu0 %v1489
        %1661 = vmatprep.subr.mxu0 0.0
        %1662 = vmatpush1.msra.mxu0 %v1488
        %1663 = vmatprep.subr.mxu0 0.0
        %1664 = vmatpush1.msra.mxu0 %v1487
        %1665 = vmatprep.subr.mxu0 0.0
        %1666 = vmatpush1.msra.mxu0 %v1486
        %1667 = vmatprep.subr.mxu0 0.0
        %1668 = vmatpush1.msra.mxu0 %v1485
        %1669 = vmatprep.subr.mxu0 0.0
        %1670 = vmatpush1.msra.mxu0 %v1484
        %1671 = vmatprep.subr.mxu0 0.0
        %1672 = vmatpush1.msra.mxu0 %v1483
        %1673 = vmatprep.subr.mxu0 0.0
        %1674 = vmatpush1.msra.mxu0 %v1482
        %1675 = vmatprep.subr.mxu0 0.0
        %1676 = vmatpush2.msra.mxu0 0.0
        %1677 = vmatprep.subr.mxu0 0.0
        %1678 = vmatpush2.msra.mxu0 0.0
        %1679 = vmatprep.subr.mxu0 0.0
        %1680 = vmatpush2.msra.mxu0 0.0
        %1681 = vmatprep.subr.mxu0 0.0
        %1682 = vmatpush2.msra.mxu0 0.0
        %1683 = vmatprep.subr.mxu0 0.0
        %1684 = vmatpush2.msra.mxu0 0.0
        %1685 = vmatprep.subr.mxu0 0.0
        %1686 = vmatpush2.msra.mxu0 0.0
        %1687 = vmatprep.subr.mxu0 0.0
        %1688 = vmatpush2.msra.mxu0 0.0
        %1689 = vmatprep.subr.mxu0 0.0
        %1690 = vmatpush2.msra.mxu0 0.0
        %1691 = vmatprep.subr.mxu0 0.0
        %1692 = vmatpush2.msra.mxu0 0.0
        %1693 = vmatprep.subr.mxu0 0.0
        %1694 = vmatpush2.msra.mxu0 0.0
        %1695 = vmatprep.subr.mxu0 0.0
        %1696 = vmatpush2.msra.mxu0 0.0
        %1697 = vmatprep.subr.mxu0 0.0
        %1698 = vmatpush2.msra.mxu0 0.0
        %1699 = vmatprep.subr.mxu0 0.0
        %1700 = vmatpush2.msra.mxu0 0.0
        %1701 = vmatprep.subr.mxu0 0.0
        %1702 = vmatpush2.msra.mxu0 0.0
        %1703 = vmatprep.subr.mxu0 0.0
        %1704 = vmatpush2.msra.mxu0 0.0
        %1705 = vmatprep.subr.mxu0 0.0
        %1706 = vmatpush2.msra.mxu0 0.0
        %1707 = vmatprep.mubr.f32.mxu0 0.0
        %1708 = vmatmul.mubr.f32.gmra.mxu0 %v1403
        %v1709 = vpop.f32.mrf.mxu0
        %v1710 = vadd.f32 %v1565, %v1709
        %v1711 = vpop.f32.mrf.mxu0
        %1712 = vmatprep.mubr.f32.mxu0 0.0
        %1713 = vmatmul.mubr.f32.gmra.mxu0 %v1406
        %v1714 = vpop.f32.mrf.mxu0
        %v1715 = vadd.f32 %v1570, %v1714
        %v1716 = vpop.f32.mrf.mxu0
        %1717 = vmatprep.mubr.f32.mxu0 0.0
        %1718 = vmatmul.mubr.f32.gmra.mxu0 %v1409
        %v1719 = vpop.f32.mrf.mxu0
        %v1720 = vadd.f32 %v1575, %v1719
        %v1721 = vpop.f32.mrf.mxu0
        %1722 = vmatprep.mubr.f32.mxu0 0.0
        %1723 = vmatmul.mubr.f32.gmra.mxu0 %v1412
        %v1724 = vpop.f32.mrf.mxu0
        %v1725 = vadd.f32 %v1580, %v1724
        %v1726 = vpop.f32.mrf.mxu0
        %1727 = vmatprep.mubr.f32.mxu0 0.0
        %1728 = vmatmul.mubr.f32.gmra.mxu0 %v1415
        %v1729 = vpop.f32.mrf.mxu0
        %v1730 = vadd.f32 %v1585, %v1729
        %v1731 = vpop.f32.mrf.mxu0
        %1732 = vmatprep.mubr.f32.mxu0 0.0
        %1733 = vmatmul.mubr.f32.gmra.mxu0 %v1418
        %v1734 = vpop.f32.mrf.mxu0
        %v1735 = vadd.f32 %v1590, %v1734
        %v1736 = vpop.f32.mrf.mxu0
        %1737 = vmatprep.mubr.f32.mxu0 0.0
        %1738 = vmatmul.mubr.f32.gmra.mxu0 %v1421
        %v1739 = vpop.f32.mrf.mxu0
        %v1740 = vadd.f32 %v1595, %v1739
        %v1741 = vpop.f32.mrf.mxu0
        %1742 = vmatprep.mubr.f32.mxu0 0.0
        %1743 = vmatmul.mubr.f32.gmra.mxu0 %v1424
        %v1744 = vpop.f32.mrf.mxu0
        %v1745 = vadd.f32 %v1600, %v1744
        %v1746 = vpop.f32.mrf.mxu0
        %1747 = vmatprep.mubr.f32.mxu0 0.0
        %1748 = vmatmul.mubr.f32.gmra.mxu0 %v1427
        %v1749 = vpop.f32.mrf.mxu0
        %v1750 = vadd.f32 %v1605, %v1749
        %v1751 = vpop.f32.mrf.mxu0
        %1752 = vmatprep.mubr.f32.mxu0 0.0
        %1753 = vmatmul.mubr.f32.gmra.mxu0 %v1430
        %v1754 = vpop.f32.mrf.mxu0
        %v1755 = vadd.f32 %v1610, %v1754
        %v1756 = vpop.f32.mrf.mxu0
        %1757 = vmatprep.mubr.f32.mxu0 0.0
        %1758 = vmatmul.mubr.f32.gmra.mxu0 %v1433
        %v1759 = vpop.f32.mrf.mxu0
        %v1760 = vadd.f32 %v1615, %v1759
        %v1761 = vpop.f32.mrf.mxu0
        %1762 = vmatprep.mubr.f32.mxu0 0.0
        %1763 = vmatmul.mubr.f32.gmra.mxu0 %v1436
        %v1764 = vpop.f32.mrf.mxu0
        %v1765 = vadd.f32 %v1620, %v1764
        %v1766 = vpop.f32.mrf.mxu0
        %1767 = vmatprep.mubr.f32.mxu0 0.0
        %1768 = vmatmul.mubr.f32.gmra.mxu0 %v1439
        %v1769 = vpop.f32.mrf.mxu0
        %v1770 = vadd.f32 %v1625, %v1769
        %v1771 = vpop.f32.mrf.mxu0
        %1772 = vmatprep.mubr.f32.mxu0 0.0
        %1773 = vmatmul.mubr.f32.gmra.mxu0 %v1442
        %v1774 = vpop.f32.mrf.mxu0
        %v1775 = vadd.f32 %v1630, %v1774
        %v1776 = vpop.f32.mrf.mxu0
        %1777 = vmatprep.mubr.f32.mxu0 0.0
        %1778 = vmatmul.mubr.f32.gmra.mxu0 %v1445
        %v1779 = vpop.f32.mrf.mxu0
        %v1780 = vadd.f32 %v1635, %v1779
        %v1781 = vpop.f32.mrf.mxu0
        %1782 = vmatprep.mubr.f32.mxu0 0.0
        %1783 = vmatmul.mubr.f32.gmra.mxu0 %v1448
        %v1784 = vpop.f32.mrf.mxu0
        %v1785 = vadd.f32 %v1640, %v1784
        %v1786 = vpop.f32.mrf.mxu0
        %1787 = vdwg.mxu0
        %v1788 = vadd.f32 %v1322, %v1710
        %v1789 = vadd.f32 %v1327, %v1715
        %v1790 = vadd.f32 %v1332, %v1720
        %v1791 = vadd.f32 %v1337, %v1725
        %v1792 = vadd.f32 %v1342, %v1730
        %v1793 = vadd.f32 %v1347, %v1735
        %v1794 = vadd.f32 %v1352, %v1740
        %v1795 = vadd.f32 %v1357, %v1745
        %v1796 = vadd.f32 %v1362, %v1750
        %v1797 = vadd.f32 %v1367, %v1755
        %v1798 = vadd.f32 %v1372, %v1760
        %v1799 = vadd.f32 %v1377, %v1765
        %v1800 = vadd.f32 %v1382, %v1770
        %v1801 = vadd.f32 %v1387, %v1775
        %v1802 = vadd.f32 %v1392, %v1780
        %v1803 = vadd.f32 %v1397, %v1785
        %v1804 = vld [vmem:[%s4] sm:$0x1]
        %v1806 = vlaneseq
        %v1807 = vshrl.u32 %v1806, 7
        %v1808 = vsub.s32 0, %v1807
        %v1809 = vrot.slane %v1804, %v1808
        %v1811 = vadd.f32 %v1788, %v1809
        %v1812 = vadd.f32 %v1789, %v1809
        %v1813 = vadd.f32 %v1790, %v1809
        %v1814 = vadd.f32 %v1791, %v1809
        %v1815 = vadd.f32 %v1792, %v1809
        %v1816 = vadd.f32 %v1793, %v1809
        %v1817 = vadd.f32 %v1794, %v1809
        %v1818 = vadd.f32 %v1795, %v1809
        %v1819 = vadd.f32 %v1796, %v1809
        %v1820 = vadd.f32 %v1797, %v1809
        %v1821 = vadd.f32 %v1798, %v1809
        %v1822 = vadd.f32 %v1799, %v1809
        %v1823 = vadd.f32 %v1800, %v1809
        %v1824 = vadd.f32 %v1801, %v1809
        %v1825 = vadd.f32 %v1802, %v1809
        %v1826 = vadd.f32 %v1803, %v1809
        %1827 = vst [vmem:[%s367] sm:$0xff] %v1811
        %1828 = vst [vmem:[%s367 + $0x8] sm:$0xff] %v1812
        %1829 = vst [vmem:[%s367 + $0x10] sm:$0xff] %v1813
        %1830 = vst [vmem:[%s367 + $0x18] sm:$0xff] %v1814
        %1831 = vst [vmem:[%s367 + $0x20] sm:$0xff] %v1815
        %1832 = vst [vmem:[%s367 + $0x28] sm:$0xff] %v1816
        %1833 = vst [vmem:[%s367 + $0x30] sm:$0xff] %v1817
        %1834 = vst [vmem:[%s367 + $0x38] sm:$0xff] %v1818
        %1835 = vst [vmem:[%s367 + $0x40] sm:$0xff] %v1819
        %1836 = vst [vmem:[%s367 + $0x48] sm:$0xff] %v1820
        %1837 = vst [vmem:[%s367 + $0x50] sm:$0xff] %v1821
        %1838 = vst [vmem:[%s367 + $0x58] sm:$0xff] %v1822
        %1839 = vst [vmem:[%s367 + $0x60] sm:$0xff] %v1823
        %1840 = vst [vmem:[%s367 + $0x68] sm:$0xff] %v1824
        %1841 = vst [vmem:[%s367 + $0x70] sm:$0xff] %v1825
        %1842 = vst [vmem:[%s367 + $0x78] sm:$0xff] %v1826
        %v1843 = vmul.f32 %v1811, %v1811
        %v1844 = vmul.f32 %v1812, %v1812
        %v1845 = vmul.f32 %v1813, %v1813
        %v1846 = vmul.f32 %v1814, %v1814
        %v1847 = vmul.f32 %v1815, %v1815
        %v1848 = vmul.f32 %v1816, %v1816
        %v1849 = vmul.f32 %v1817, %v1817
        %v1850 = vmul.f32 %v1818, %v1818
        %v1851 = vmul.f32 %v1819, %v1819
        %v1852 = vmul.f32 %v1820, %v1820
        %v1853 = vmul.f32 %v1821, %v1821
        %v1854 = vmul.f32 %v1822, %v1822
        %v1855 = vmul.f32 %v1823, %v1823
        %v1856 = vmul.f32 %v1824, %v1824
        %v1857 = vmul.f32 %v1825, %v1825
        %v1858 = vmul.f32 %v1826, %v1826
        %v1859 = vadd.f32 %v1811, %v1812
        %v1860 = vadd.f32 %v1859, %v1813
        %v1861 = vadd.f32 %v1860, %v1814
        %v1862 = vadd.f32 %v1861, %v1815
        %v1863 = vadd.f32 %v1862, %v1816
        %v1864 = vadd.f32 %v1863, %v1817
        %v1865 = vadd.f32 %v1864, %v1818
        %v1866 = vadd.f32 %v1865, %v1819
        %v1867 = vadd.f32 %v1866, %v1820
        %v1868 = vadd.f32 %v1867, %v1821
        %v1869 = vadd.f32 %v1868, %v1822
        %v1870 = vadd.f32 %v1869, %v1823
        %v1871 = vadd.f32 %v1870, %v1824
        %v1872 = vadd.f32 %v1871, %v1825
        %v1873 = vadd.f32 %v1872, %v1826
        %v1874 = vadd.f32 %v1843, %v1844
        %v1875 = vadd.f32 %v1874, %v1845
        %v1876 = vadd.f32 %v1875, %v1846
        %v1877 = vadd.f32 %v1876, %v1847
        %v1878 = vadd.f32 %v1877, %v1848
        %v1879 = vadd.f32 %v1878, %v1849
        %v1880 = vadd.f32 %v1879, %v1850
        %v1881 = vadd.f32 %v1880, %v1851
        %v1882 = vadd.f32 %v1881, %v1852
        %v1883 = vadd.f32 %v1882, %v1853
        %v1884 = vadd.f32 %v1883, %v1854
        %v1885 = vadd.f32 %v1884, %v1855
        %v1886 = vadd.f32 %v1885, %v1856
        %v1887 = vadd.f32 %v1886, %v1857
        %v1888 = vadd.f32 %v1887, %v1858
        %v1889 = vrot.slane %v1873, 4
        %v1890 = vadd.f32 %v1873, %v1889
        %v1891 = vrot.slane %v1890, 2
        %v1892 = vadd.f32 %v1890, %v1891
        %v1893 = vrot.slane %v1892, 1
        %v1894 = vadd.f32 %v1892, %v1893
        %v1895 = vrot.slane %v1888, 4
        %v1896 = vadd.f32 %v1888, %v1895
        %v1897 = vrot.slane %v1896, 2
        %v1898 = vadd.f32 %v1896, %v1897
        %v1899 = vrot.slane %v1898, 1
        %v1900 = vadd.f32 %v1898, %v1899
        %1901 = vst [vmem:[%s374] sm:$0x1] %v1894
        %1902 = vst [vmem:[%s374 + $0x1] sm:$0x1] %v1900
        %s1903 = sand.u32 %s188, 1
        %s1904 = scalar_lea.sflag [#allocation5], %s1903
        %s1905 = sand.u32 %s188, 1
        %s1906 = smul.addr %s1905, 128
        %s1907 = scalar_lea.vmem [#allocation4], %s1906
        %s1908 = sand.u32 %s216, 1
        %s1909 = scalar_lea.sflag [#allocation7], %s1908
        %s1910 = sand.u32 %s216, 1
        %s1911 = smul.addr %s1910, 2
        %s1912 = scalar_lea.vmem [#allocation6], %s1911
        // Predicated region
        $region41: #{tpu_custom_call.1} parent=39 // pred_check
          %p1913 = pneg %p198
        $region42: #{tpu_custom_call.1} parent=39 // pred_check_branch
          %1915 = sbr.rel (%p1913) target = $region44
        $region43: #{tpu_custom_call.1} parent=39 // pred_region
          %s1916 = smul.u32 8, %s29
          %s1918 = ssub.s32 2048, 2048
          %1919 = vsyncadd %s1904, %s1918
          %s1920 = smul.addr %s1916, 2
          %s1921 = smul.addr %s28, 32
          %s1922 = sadd.s32 %s1920, %s1921
          %s1923 = smul.addr %s1922, 128
          %s1924 = scalar_lea.hbm %s5, %s1923
          %s1925 = sshll.u32 %s1907, 4
          %s1926 = int_to_ptr.vmem [resolvable:$true] %s1925
          %1931 = dma.vmem_to_hbm [thread:$0]  %s1926, 2048, %s1924, %s1904, 128, 128, 8
        $region44: #{tpu_custom_call.1} parent=39 // pred_fallthru
          _
        // Predicated region
        $region45: #{tpu_custom_call.1} parent=39 // pred_check
          %p1932 = pneg %p226
        $region46: #{tpu_custom_call.1} parent=39 // pred_check_branch
          %1934 = sbr.rel (%p1932) target = $region48
        $region47: #{tpu_custom_call.1} parent=39 // pred_region
          %s1936 = ssub.s32 32, 32
          %1937 = vsyncadd %s1909, %s1936
          %s1938 = smul.addr %s28, 2
          %s1939 = sadd.s32 %s29, %s1938
          %s1940 = smul.addr %s1939, 32
          %s1941 = scalar_lea.hbm %s6, %s1940
          %s1943 = sshll.u32 %s1912, 4
          %s1944 = int_to_ptr.vmem [resolvable:$true] %s1943
          %1946 = dma.vmem_to_hbm [thread:$0]  %s1944, 32, %s1941, %s1909
        $region48: #{tpu_custom_call.1} parent=39 // pred_fallthru
          _
      $region40: #{tpu_custom_call.1} parent=5 // pred_fallthru
        _
      %p1947 = scmp.le.s32.totalorder 2, %s19
      // Predicated region
      $region49: #{tpu_custom_call.1} parent=5 // pred_check
        %p1948 = pneg %p1947
      $region50: #{tpu_custom_call.1} parent=5 // pred_check_branch
        %1950 = sbr.rel (%p1948) target = $region52
      $region51: #{tpu_custom_call.1} parent=5 // pred_region
        %s1951 = ssub.s32 %s19, 2
        // Predicated region
        $region53: #{tpu_custom_call.1} parent=51 // pred_check
          %p1952 = pneg %p204
        $region54: #{tpu_custom_call.1} parent=51 // pred_check_branch
          %1954 = sbr.rel (%p1952) target = $region56
        $region55: #{tpu_custom_call.1} parent=51 // pred_region
          %s1955 = sand.u32 %s189, 1
          %s1956 = scalar_lea.sflag [#allocation5], %s1955
          %s1957 = sand.u32 %s189, 1
          %s1958 = smul.addr %s1957, 128
          %s1959 = scalar_lea.vmem [#allocation4], %s1958
          %1960 = dma.done %s1956, 2048
        $region56: #{tpu_custom_call.1} parent=51 // pred_fallthru
          _
        // Predicated region
        $region57: #{tpu_custom_call.1} parent=51 // pred_check
          %p1961 = pneg %p232
        $region58: #{tpu_custom_call.1} parent=51 // pred_check_branch
          %1963 = sbr.rel (%p1961) target = $region60
        $region59: #{tpu_custom_call.1} parent=51 // pred_region
          %s1964 = sand.u32 %s217, 1
          %s1965 = scalar_lea.sflag [#allocation7], %s1964
          %s1966 = sand.u32 %s217, 1
          %s1967 = smul.addr %s1966, 2
          %s1968 = scalar_lea.vmem [#allocation6], %s1967
          %1969 = dma.done %s1965, 32
        $region60: #{tpu_custom_call.1} parent=51 // pred_fallthru
          _
      $region52: #{tpu_custom_call.1} parent=5 // pred_fallthru
        _
    $region6: #{tpu_custom_call.1} parent=1 // loop_footer
      %s23 = sadd.s32 1, %s19
    $region7: #{tpu_custom_call.1} parent=1 // loop_footer_branch
      %18 = sbr.rel target = $region3
    $region8: #{tpu_custom_call.1} parent=1 // loop_exit
      _
    %1970 = vsyncpa [#allocation5], 1
    %s1971 = scalar_lea.sflag [#allocation5], 1
    %1972 = vsyncpa %s1971, 1
    %1973 = vsyncpa [#allocation7], 1
    %s1974 = scalar_lea.sflag [#allocation7], 1
    %1975 = vsyncpa %s1974, 1

</llo_original>
